<compile_context>
chip_gen: v5e
topology: v5e:2x2
jax: 0.10.0
libtpu: 0.0.40
codegen_flags: <defaults>
</compile_context>

<pallas_src>
import math

import jax
import jax.numpy as jnp
from jax import lax
from jax.experimental import pallas as pl
from jax.experimental.pallas import tpu as pltpu

LN_EPS = 1e-5            # torch.nn.LayerNorm default
NEG_INF = -1e9           # masked_fill value in the reference
_VMEM_LIMIT = 64 * 1024 * 1024


# ----------------------------- in-kernel helpers -----------------------------
def _layer_norm(x, gamma, beta):
    # x: (bt, S, D) f32; gamma/beta: (1, D) f32
    mu = jnp.mean(x, axis=-1, keepdims=True)
    var = jnp.mean(jnp.square(x - mu), axis=-1, keepdims=True)   # biased var (torch LN)
    return (x - mu) * lax.rsqrt(var + LN_EPS) * gamma + beta


def _matmul_bias(x_bf2d, w_bf, b):
    # x_bf2d: (M, D) bf16, w_bf: (D, N) bf16, b: (1, N) f32 -> (M, N) f32
    return jnp.dot(x_bf2d, w_bf, preferred_element_type=jnp.float32) + b


def _attention(q, k, v_bf, bias):
    # q:(bt,Sq,dk) f32, k:(bt,Sk,dk) f32, v_bf:(bt,Sk,D) bf16,
    # bias broadcastable to (bt,Sq,Sk) f32.  MXU operands bf16, stats f32.
    s = jnp.einsum("bqd,bkd->bqk",
                   q.astype(jnp.bfloat16), k.astype(jnp.bfloat16),
                   preferred_element_type=jnp.float32) + bias
    m = jnp.max(s, axis=-1, keepdims=True)
    e = jnp.exp(s - m)
    p = e * pl.reciprocal(jnp.sum(e, axis=-1, keepdims=True), approx=True)
    return jnp.einsum("bqk,bkd->bqd", p.astype(jnp.bfloat16), v_bf,
                      preferred_element_type=jnp.float32)


# ------------------------------ encoder kernel -------------------------------
def encoder_stack_kernel(x_ref, bias_ref, w_ref, v_ref, out_ref):
    layer = pl.program_id(1)

    @pl.when(layer == 0)
    def _():
        out_ref[...] = x_ref[...]          # seed the resident residual stream

    x = out_ref[...]                       # (bt, S, D) f32, carried across layers
    bias = bias_ref[...]                   # (bt, 1, S) additive src-pad bias

    bt, S, D = x.shape
    w = w_ref[0]                           # (D, 2dk + D) bf16 weight slab
    vec = v_ref[0]                         # (1, 2dk + 5D) f32 vector slab
    two_dk = w.shape[1] - D
    dk = two_dk // 2

    wqk, w1 = w[:, :two_dk], w[:, two_dk:]
    o = 0
    bqk = vec[:, o:o + two_dk]; o += two_dk
    b1 = vec[:, o:o + D]; o += D
    g1 = vec[:, o:o + D]; o += D
    be1 = vec[:, o:o + D]; o += D
    g2 = vec[:, o:o + D]; o += D
    be2 = vec[:, o:o + D]

    x_bf = x.astype(jnp.bfloat16)          # value operand for attention

    # fused Q|K projection (1/sqrt(dk) pre-folded into the Q half of wqk/bqk)
    qk = _matmul_bias(x_bf.reshape(bt * S, D), wqk, bqk)
    q = qk[:, :dk].reshape(bt, S, dk)
    k = qk[:, dk:].reshape(bt, S, dk)

    x1 = _layer_norm(_attention(q, k, x_bf, bias) + x, g1, be1)

    # position-wise feed-forward (Linear + ReLU), residual + LayerNorm 2
    ff = jnp.maximum(
        _matmul_bias(x1.reshape(bt * S, D).astype(jnp.bfloat16), w1, b1), 0.0)
    x2 = _layer_norm(ff.reshape(bt, S, D) + x1, g2, be2)

    out_ref[...] = x2


# ------------------------------ decoder kernel -------------------------------
def decoder_stack_kernel(x_ref, mem_ref, tpad_ref, sbias_ref, w_ref, v_ref, out_ref):
    layer = pl.program_id(1)

    @pl.when(layer == 0)
    def _():
        out_ref[...] = x_ref[...]

    x = out_ref[...]                       # (bt, St, D) f32 residual stream
    mem_bf = mem_ref[...]                  # (bt, Ss, D) bf16 encoder memory (resident)
    sbias = sbias_ref[...]                 # (bt, 1, Ss) additive src-pad bias

    bt, St, D = x.shape
    Ss = mem_bf.shape[1]
    w = w_ref[0]                           # (D, 4dk + D) bf16 weight slab
    vec = v_ref[0]                         # (1, 4dk + 7D) f32 vector slab
    four_dk = w.shape[1] - D
    dk = four_dk // 4
    two_dk = 2 * dk

    wqk1 = w[:, :two_dk]
    wqk2 = w[:, two_dk:2 * two_dk]
    w1 = w[:, 2 * two_dk:]
    o = 0
    bqk1 = vec[:, o:o + two_dk]; o += two_dk
    bqk2 = vec[:, o:o + two_dk]; o += two_dk
    b1 = vec[:, o:o + D]; o += D
    g1 = vec[:, o:o + D]; o += D
    be1 = vec[:, o:o + D]; o += D
    g2 = vec[:, o:o + D]; o += D
    be2 = vec[:, o:o + D]; o += D
    g3 = vec[:, o:o + D]; o += D
    be3 = vec[:, o:o + D]

    # causal (subsequent-position) additive bias rebuilt in-kernel: only the
    # (bt,1,St) padding component is DMA'd, never a dense (B,St,St) tensor.
    qi = lax.broadcasted_iota(jnp.int32, (St, St), 0)
    ki = lax.broadcasted_iota(jnp.int32, (St, St), 1)
    causal = jnp.where(ki > qi, jnp.float32(NEG_INF), jnp.float32(0.0))
    tbias = tpad_ref[...] + causal[None, :, :]       # (bt, St, St)

    # --- masked self-attention (value == x), fused Q|K projection -------------
    x_bf = x.astype(jnp.bfloat16)
    qk = _matmul_bias(x_bf.reshape(bt * St, D), wqk1, bqk1)
    q = qk[:, :dk].reshape(bt, St, dk)
    k = qk[:, dk:].reshape(bt, St, dk)
    x = _layer_norm(_attention(q, k, x_bf, tbias) + x, g1, be1)

    # --- source attention over the encoder memory (value == memory) -----------
    x_bf = x.astype(jnp.bfloat16)
    q = _matmul_bias(x_bf.reshape(bt * St, D), wqk2[:, :dk],
                     bqk2[:, :dk]).reshape(bt, St, dk)
    k = _matmul_bias(mem_bf.reshape(bt * Ss, D), wqk2[:, dk:],
                     bqk2[:, dk:]).reshape(bt, Ss, dk)
    x = _layer_norm(_attention(q, k, mem_bf, sbias) + x, g2, be2)

    # --- position-wise feed-forward --------------------------------------------
    ff = jnp.maximum(
        _matmul_bias(x.reshape(bt * St, D).astype(jnp.bfloat16), w1, b1), 0.0)
    x = _layer_norm(ff.reshape(bt, St, D) + x, g3, be3)

    out_ref[...] = x


# ------------------------------- pallas wrappers ------------------------------
def encoder_forward(x, src_bias, packed, *, batch_tile=None):
    """Fused N-layer encoder stack.  x:(B,S,D) f32, src_bias:(B,1,S) f32."""
    B, S, D = x.shape
    n_layers = packed["w"].shape[0]
    bt = B if batch_tile is None else batch_tile
    assert B % bt == 0

    bmap = lambda ib, l: (ib, 0, 0)          # follows the batch tile
    lmap = lambda ib, l: (l, 0, 0)           # follows the layer axis

    return pl.pallas_call(
        encoder_stack_kernel,
        out_shape=jax.ShapeDtypeStruct((B, S, D), jnp.float32),
        grid_spec=pltpu.PrefetchScalarGridSpec(
            num_scalar_prefetch=0,
            grid=(B // bt, n_layers),
            in_specs=[
                pl.BlockSpec((bt, S, D), bmap),                      # layer-0 input
                pl.BlockSpec((bt, 1, S), bmap),                      # additive mask bias
                pl.BlockSpec((1,) + packed["w"].shape[1:], lmap),    # bf16 weight slab
                pl.BlockSpec((1,) + packed["v"].shape[1:], lmap),    # f32 vector slab
            ],
            out_specs=pl.BlockSpec((bt, S, D), bmap),                # carries activation
        ),
        compiler_params=pltpu.CompilerParams(
            dimension_semantics=("parallel", "arbitrary"),
            vmem_limit_bytes=_VMEM_LIMIT),
    )(x, src_bias, packed["w"], packed["v"])


def decoder_forward(x, memory_bf16, tgt_pad_bias, src_bias, packed, *, batch_tile=None):
    """Fused N-layer decoder stack. x:(B,St,D) f32, memory_bf16:(B,Ss,D) bf16."""
    B, S_t, D = x.shape
    S_s = memory_bf16.shape[1]
    n_layers = packed["w"].shape[0]
    bt = B if batch_tile is None else batch_tile
    assert B % bt == 0

    bmap = lambda ib, l: (ib, 0, 0)
    lmap = lambda ib, l: (l, 0, 0)

    return pl.pallas_call(
        decoder_stack_kernel,
        out_shape=jax.ShapeDtypeStruct((B, S_t, D), jnp.float32),
        grid_spec=pltpu.PrefetchScalarGridSpec(
            num_scalar_prefetch=0,
            grid=(B // bt, n_layers),
            in_specs=[
                pl.BlockSpec((bt, S_t, D), bmap),                    # layer-0 input
                pl.BlockSpec((bt, S_s, D), bmap),                    # encoder memory bf16
                pl.BlockSpec((bt, 1, S_t), bmap),                    # tgt pad bias
                pl.BlockSpec((bt, 1, S_s), bmap),                    # src pad bias
                pl.BlockSpec((1,) + packed["w"].shape[1:], lmap),    # bf16 weight slab
                pl.BlockSpec((1,) + packed["v"].shape[1:], lmap),    # f32 vector slab
            ],
            out_specs=pl.BlockSpec((bt, S_t, D), bmap),
        ),
        compiler_params=pltpu.CompilerParams(
            dimension_semantics=("parallel", "arbitrary"),
            vmem_limit_bytes=_VMEM_LIMIT),
    )(x, memory_bf16, tgt_pad_bias, src_bias, packed["w"], packed["v"])


def positional_encoding_table(max_len, d_model):
    position = jnp.arange(max_len, dtype=jnp.float32)[:, None]
    div_term = jnp.exp(jnp.arange(0, d_model, 2, dtype=jnp.float32)
                       * (-math.log(10000.0) / d_model))
    pe = jnp.zeros((max_len, d_model), jnp.float32)
    pe = pe.at[:, 0::2].set(jnp.sin(position * div_term))
    pe = pe.at[:, 1::2].set(jnp.cos(position * div_term))
    return pe


def encoder_decoder_forward(src, tgt, src_mask, tgt_mask, params):
    """EncoderDecoder.forward: decode(encode(src, src_mask), src_mask, tgt, tgt_mask).

    tgt_mask may be the usual (B,St,St) pad*causal mask (its last row is the
    padding component) or already the (B,1,St) padding mask; the causal part is
    always rebuilt inside the decoder kernel.
    """
    pe = params["pe"]
    src_x = (params["src_emb"][src] + pe[: src.shape[1]][None, :, :]).astype(jnp.float32)
    tgt_x = (params["tgt_emb"][tgt] + pe[: tgt.shape[1]][None, :, :]).astype(jnp.float32)

    src_bias = jnp.where(src_mask == 0, jnp.float32(NEG_INF), jnp.float32(0.0))
    if tgt_mask.ndim == 3 and tgt_mask.shape[1] > 1:
        tgt_pad = tgt_mask[:, -1:, :]        # last causal row is all-ones -> pad mask
    else:
        tgt_pad = tgt_mask.reshape(tgt_mask.shape[0], 1, -1)
    tgt_pad_bias = jnp.where(tgt_pad == 0, jnp.float32(NEG_INF), jnp.float32(0.0))

    memory = encoder_forward(src_x, src_bias, params["encoder_packed"])
    return decoder_forward(tgt_x, memory.astype(jnp.bfloat16),
                           tgt_pad_bias, src_bias, params["decoder_packed"])


# ------------------------------ parameter setup -------------------------------
def make_raw_params(key, num_encoder, num_decoder, d_model, d_k, src_vocab, tgt_vocab):
    def linear(k, din, dout):
        k1, k2 = jax.random.split(k)
        s = 1.0 / math.sqrt(din)
        return (jax.random.uniform(k1, (din, dout), jnp.float32, -s, s),
                jax.random.uniform(k2, (1, dout), jnp.float32, -s, s))

    ones = lambda: jnp.ones((1, d_model), jnp.float32)
    zeros = lambda: jnp.zeros((1, d_model), jnp.float32)

    keys = jax.random.split(key, 2 + num_encoder + num_decoder)
    src_emb = jax.random.normal(keys[0], (src_vocab, d_model), jnp.float32)
    tgt_emb = jax.random.normal(keys[1], (tgt_vocab, d_model), jnp.float32)

    enc_layers = []
    for i in range(num_encoder):
        ks = jax.random.split(keys[2 + i], 3)
        wq, bq = linear(ks[0], d_model, d_k)
        wk, bk = linear(ks[1], d_model, d_k)
        w1, b1 = linear(ks[2], d_model, d_model)
        enc_layers.append(dict(wq=wq, bq=bq, wk=wk, bk=bk, w1=w1, b1=b1,
                               g1=ones(), be1=zeros(), g2=ones(), be2=zeros()))

    dec_layers = []
    for i in range(num_decoder):
        ks = jax.random.split(keys[2 + num_encoder + i], 5)
        wq1, bq1 = linear(ks[0], d_model, d_k)
        wk1, bk1 = linear(ks[1], d_model, d_k)
        wq2, bq2 = linear(ks[2], d_model, d_k)
        wk2, bk2 = linear(ks[3], d_model, d_k)
        w1, b1 = linear(ks[4], d_model, d_model)
        dec_layers.append(dict(wq1=wq1, bq1=bq1, wk1=wk1, bk1=bk1,
                               wq2=wq2, bq2=bq2, wk2=wk2, bk2=bk2, w1=w1, b1=b1,
                               g1=ones(), be1=zeros(), g2=ones(), be2=zeros(),
                               g3=ones(), be3=zeros()))

    return dict(src_emb=src_emb, tgt_emb=tgt_emb,
                enc_layers=enc_layers, dec_layers=dec_layers)


def pack_params(raw, pe, d_k):
    """One-time constant transform: per stack, pack all matmul weights into one
    bf16 slab (Wq|Wk fused) and all biases / LayerNorm vectors into one f32 slab,
    with the 1/sqrt(d_k) scale folded into Wq/bq BEFORE the bf16 cast."""
    scale = 1.0 / math.sqrt(d_k)
    flat = lambda a: a.reshape(-1)

    def enc_layer(p):
        wqk = jnp.concatenate([p["wq"] * scale, p["wk"]], axis=1)            # (D, 2dk)
        w = jnp.concatenate([wqk, p["w1"]], axis=1).astype(jnp.bfloat16)     # (D, 2dk+D)
        vec = jnp.concatenate([
            flat(p["bq"] * scale), flat(p["bk"]),
            flat(p["b1"]), flat(p["g1"]), flat(p["be1"]),
            flat(p["g2"]), flat(p["be2"])]).astype(jnp.float32)
        return w, vec.reshape(1, -1)

    def dec_layer(p):
        wqk1 = jnp.concatenate([p["wq1"] * scale, p["wk1"]], axis=1)
        wqk2 = jnp.concatenate([p["wq2"] * scale, p["wk2"]], axis=1)
        w = jnp.concatenate([wqk1, wqk2, p["w1"]], axis=1).astype(jnp.bfloat16)
        vec = jnp.concatenate([
            flat(p["bq1"] * scale), flat(p["bk1"]),
            flat(p["bq2"] * scale), flat(p["bk2"]),
            flat(p["b1"]),
            flat(p["g1"]), flat(p["be1"]),
            flat(p["g2"]), flat(p["be2"]),
            flat(p["g3"]), flat(p["be3"])]).astype(jnp.float32)
        return w, vec.reshape(1, -1)

    enc_w, enc_v = zip(*[enc_layer(p) for p in raw["enc_layers"]])
    dec_w, dec_v = zip(*[dec_layer(p) for p in raw["dec_layers"]])
    return dict(
        src_emb=raw["src_emb"], tgt_emb=raw["tgt_emb"], pe=pe,
        encoder_packed=dict(w=jnp.stack(enc_w, axis=0), v=jnp.stack(enc_v, axis=0)),
        decoder_packed=dict(w=jnp.stack(dec_w, axis=0), v=jnp.stack(dec_v, axis=0)),
    )


# -------------------------- pure-JAX reference model --------------------------
def _ref_attention(q, k, v, mask, d_k):
    scores = jnp.einsum("bqd,bkd->bqk", q, k) / math.sqrt(d_k)
    scores = jnp.where(mask == 0, NEG_INF, scores)
    return jnp.einsum("bqk,bkd->bqd", jax.nn.softmax(scores, axis=-1), v)


def _ref_layer_norm(x, g, b):
    mu = x.mean(-1, keepdims=True)
    var = ((x - mu) ** 2).mean(-1, keepdims=True)
    return (x - mu) / jnp.sqrt(var + LN_EPS) * g + b


def _ref_encoder_layer(x, mask, p, d_k):
    q = x @ p["wq"] + p["bq"]
    k = x @ p["wk"] + p["bk"]
    x = _ref_layer_norm(_ref_attention(q, k, x, mask, d_k) + x, p["g1"], p["be1"])
    ff = jax.nn.relu(x @ p["w1"] + p["b1"])
    return _ref_layer_norm(ff + x, p["g2"], p["be2"])


def _ref_decoder_layer(x, mem, src_mask, tgt_mask, p, d_k):
    q = x @ p["wq1"] + p["bq1"]
    k = x @ p["wk1"] + p["bk1"]
    x = _ref_layer_norm(_ref_attention(q, k, x, tgt_mask, d_k) + x, p["g1"], p["be1"])
    q = x @ p["wq2"] + p["bq2"]
    k = mem @ p["wk2"] + p["bk2"]
    x = _ref_layer_norm(_ref_attention(q, k, mem, src_mask, d_k) + x, p["g2"], p["be2"])
    ff = jax.nn.relu(x @ p["w1"] + p["b1"])
    return _ref_layer_norm(ff + x, p["g3"], p["be3"])


def _ref_forward(src, tgt, src_mask, tgt_mask, raw, pe, d_k):
    x = raw["src_emb"][src] + pe[: src.shape[1]][None]
    for p in raw["enc_layers"]:
        x = _ref_encoder_layer(x, src_mask, p, d_k)
    mem = x
    y = raw["tgt_emb"][tgt] + pe[: tgt.shape[1]][None]
    for p in raw["dec_layers"]:
        y = _ref_decoder_layer(y, mem, src_mask, tgt_mask, p, d_k)
    return y


# ------------------------------------ main ------------------------------------
if __name__ == "__main__":
    d_model, d_k = 32, 16
    num_encoder, num_decoder = 2, 2
    src_vocab, tgt_vocab = 11, 13
    B, S_src, S_tgt = 2, 8, 8

    key = jax.random.PRNGKey(0)
    k_src, k_tgt, k_par = jax.random.split(key, 3)

    src = jax.random.randint(k_src, (B, S_src), 0, src_vocab)
    tgt = jax.random.randint(k_tgt, (B, S_tgt), 0, tgt_vocab)

    # src padding mask (B,1,S_src): last 2 tokens of batch 1 are padding
    src_mask = jnp.ones((B, 1, S_src), jnp.float32).at[1, 0, S_src - 2:].set(0.0)
    # tgt mask (B,S_tgt,S_tgt): padding AND causal ("subsequent") mask
    tgt_pad = jnp.ones((B, 1, S_tgt), jnp.float32).at[1, 0, S_tgt - 1:].set(0.0)
    causal = jnp.tril(jnp.ones((S_tgt, S_tgt), jnp.float32))[None]
    tgt_mask = tgt_pad * causal

    raw = make_raw_params(k_par, num_encoder, num_decoder, d_model, d_k,
                          src_vocab, tgt_vocab)
    pe = positional_encoding_table(5000, d_model)
    params = pack_params(raw, pe, d_k)

    fwd = jax.jit(encoder_decoder_forward)
    out = jax.block_until_ready(fwd(src, tgt, src_mask, tgt_mask, params))

    ref = _ref_forward(src, tgt, src_mask, tgt_mask, raw, pe, d_k)
    assert out.shape == (B, S_tgt, d_model)
    # bf16 MXU operands (f32 accumulation) + approx reciprocal -> compare against
    # the f32 reference with a correspondingly looser tolerance.
    err = float(jnp.max(jnp.abs(out - ref)))
    assert err < 5e-2, f"mismatch vs JAX reference: max abs err = {err}"

    print("KERNEL_OK")
</pallas_src>

<mosaic_0001>
module attributes {stable_mosaic.version = 11 : i64} {
  func.func @encoder_stack_kernel(%arg0: i32, %arg1: i32, %arg2: memref<2x8x32xf32, #tpu.memory_space<vmem>>, %arg3: memref<2x1x8xf32, #tpu.memory_space<vmem>>, %arg4: memref<1x32x64xbf16, #tpu.memory_space<vmem>>, %arg5: memref<1x1x192xf32, #tpu.memory_space<vmem>>, %arg6: memref<2x8x32xf32, #tpu.memory_space<vmem>>) attributes {dimension_semantics = [#tpu.dimension_semantics<parallel>, #tpu.dimension_semantics<arbitrary>], iteration_bounds = array<i64: 1, 2>, scalar_prefetch = 0 : i64, scratch_operands = 0 : i64, tpu.core_type = #tpu.core_type<tc>, window_params = [{transform_indices = @transform_0, window_bounds = array<i64: 2, 8, 32>}, {transform_indices = @transform_1, window_bounds = array<i64: 2, 1, 8>}, {transform_indices = @transform_2, window_bounds = array<i64: 1, 32, 64>}, {transform_indices = @transform_3, window_bounds = array<i64: 1, 1, 192>}, {transform_indices = @transform_4, window_bounds = array<i64: 2, 8, 32>}]} {
    %c0_i32 = arith.constant 0 : i32
    %0 = arith.cmpi eq, %arg1, %c0_i32 : i32
    %1 = arith.extui %0 : i1 to i32
    %c0_i32_0 = arith.constant 0 : i32
    %2 = arith.cmpi ne, %1, %c0_i32_0 : i32
    scf.if %2 {
      %c0_31 = arith.constant 0 : index
      %c0_32 = arith.constant 0 : index
      %c0_33 = arith.constant 0 : index
      %102 = vector.load %arg2[%c0_31, %c0_32, %c0_33] : memref<2x8x32xf32, #tpu.memory_space<vmem>>, vector<2x8x32xf32>
      %c0_34 = arith.constant 0 : index
      %c0_35 = arith.constant 0 : index
      %c0_36 = arith.constant 0 : index
      %103 = vector.load %arg6[%c0_34, %c0_35, %c0_36] : memref<2x8x32xf32, #tpu.memory_space<vmem>>, vector<2x8x32xf32>
      tpu.vector_store %arg6[%c0_34, %c0_35, %c0_36], %102 {strides = array<i32>} : memref<2x8x32xf32, #tpu.memory_space<vmem>>, vector<2x8x32xf32>,
    } else {
    }
    %c0 = arith.constant 0 : index
    %c0_1 = arith.constant 0 : index
    %c0_2 = arith.constant 0 : index
    %3 = vector.load %arg6[%c0, %c0_1, %c0_2] : memref<2x8x32xf32, #tpu.memory_space<vmem>>, vector<2x8x32xf32>
    %c0_3 = arith.constant 0 : index
    %c0_4 = arith.constant 0 : index
    %c0_5 = arith.constant 0 : index
    %4 = vector.load %arg3[%c0_3, %c0_4, %c0_5] : memref<2x1x8xf32, #tpu.memory_space<vmem>>, vector<2x1x8xf32>
    %c0_6 = arith.constant 0 : index
    %c0_7 = arith.constant 0 : index
    %c0_8 = arith.constant 0 : index
    %5 = vector.load %arg4[%c0_6, %c0_7, %c0_8] : memref<1x32x64xbf16, #tpu.memory_space<vmem>>, vector<1x32x64xbf16>
    %6 = vector.shape_cast %5 : vector<1x32x64xbf16> to vector<32x64xbf16>
    %c0_9 = arith.constant 0 : index
    %c0_10 = arith.constant 0 : index
    %c0_11 = arith.constant 0 : index
    %7 = vector.load %arg5[%c0_9, %c0_10, %c0_11] : memref<1x1x192xf32, #tpu.memory_space<vmem>>, vector<1x1x192xf32>
    %8 = vector.shape_cast %7 : vector<1x1x192xf32> to vector<1x192xf32>
    %9 = vector.extract_strided_slice %6 {offsets = [0, 0], sizes = [32, 32], strides = [1, 1]} : vector<32x64xbf16> to vector<32x32xbf16>
    %10 = vector.extract_strided_slice %6 {offsets = [0, 32], sizes = [32, 32], strides = [1, 1]} : vector<32x64xbf16> to vector<32x32xbf16>
    %11 = vector.extract_strided_slice %8 {offsets = [0, 0], sizes = [1, 32], strides = [1, 1]} : vector<1x192xf32> to vector<1x32xf32>
    %12 = vector.extract_strided_slice %8 {offsets = [0, 32], sizes = [1, 32], strides = [1, 1]} : vector<1x192xf32> to vector<1x32xf32>
    %13 = vector.extract_strided_slice %8 {offsets = [0, 64], sizes = [1, 32], strides = [1, 1]} : vector<1x192xf32> to vector<1x32xf32>
    %14 = vector.extract_strided_slice %8 {offsets = [0, 96], sizes = [1, 32], strides = [1, 1]} : vector<1x192xf32> to vector<1x32xf32>
    %15 = vector.extract_strided_slice %8 {offsets = [0, 128], sizes = [1, 32], strides = [1, 1]} : vector<1x192xf32> to vector<1x32xf32>
    %16 = vector.extract_strided_slice %8 {offsets = [0, 160], sizes = [1, 32], strides = [1, 1]} : vector<1x192xf32> to vector<1x32xf32>
    %17 = arith.truncf %3 : vector<2x8x32xf32> to vector<2x8x32xbf16>
    %18 = vector.shape_cast %17 : vector<2x8x32xbf16> to vector<16x32xbf16>
    %cst = arith.constant dense<0.000000e+00> : vector<16x32xf32>
    %19 = tpu.matmul %18, %9, %cst {dimension_numbers = #tpu.dot_dimension_numbers<[1], [0], [0], [1], [0, 0, 1, 1], [], []>} : vector<16x32xbf16>, vector<32x32xbf16>, vector<16x32xf32> -> vector<16x32xf32>
    %20 = vector.broadcast %11 : vector<1x32xf32> to vector<16x32xf32>
    %21 = arith.addf %19, %20 : vector<16x32xf32>
    %22 = vector.extract_strided_slice %21 {offsets = [0, 0], sizes = [16, 16], strides = [1, 1]} : vector<16x32xf32> to vector<16x16xf32>
    %23 = vector.shape_cast %22 : vector<16x16xf32> to vector<2x8x16xf32>
    %24 = vector.extract_strided_slice %21 {offsets = [0, 16], sizes = [16, 16], strides = [1, 1]} : vector<16x32xf32> to vector<16x16xf32>
    %25 = vector.shape_cast %24 : vector<16x16xf32> to vector<2x8x16xf32>
    %26 = arith.truncf %23 : vector<2x8x16xf32> to vector<2x8x16xbf16>
    %27 = arith.truncf %25 : vector<2x8x16xf32> to vector<2x8x16xbf16>
    "tpu.trace_start"() <{level = 10 : i32, message = "bqd,bkd->bqk"}> : () -> ()
    %cst_12 = arith.constant dense<0.000000e+00> : vector<2x8x8xf32>
    %28 = tpu.matmul %26, %27, %cst_12 {dimension_numbers = #tpu.dot_dimension_numbers<[2], [2], [1], [1], [0, 0, 0, 1, 1, 1], [0], [0]>} : vector<2x8x16xbf16>, vector<2x8x16xbf16>, vector<2x8x8xf32> -> vector<2x8x8xf32>
    "tpu.trace_stop"() : () -> ()
    %29 = vector.broadcast %4 : vector<2x1x8xf32> to vector<2x8x8xf32>
    %30 = arith.addf %28, %29 : vector<2x8x8xf32>
    %cst_13 = arith.constant dense<0xFF800000> : vector<2x8xf32>
    %31 = vector.multi_reduction <maximumf>, %30, %cst_13 [2] : vector<2x8x8xf32> to vector<2x8xf32>
    %32 = vector.shape_cast %31 : vector<2x8xf32> to vector<2x8x1xf32>
    %33 = vector.broadcast %32 : vector<2x8x1xf32> to vector<2x8x8xf32>
    %34 = arith.subf %30, %33 : vector<2x8x8xf32>
    %35 = math.exp %34 : vector<2x8x8xf32>
    %cst_14 = arith.constant dense<0.000000e+00> : vector<2x8xf32>
    %36 = vector.multi_reduction <add>, %35, %cst_14 [2] : vector<2x8x8xf32> to vector<2x8xf32>
    %37 = vector.shape_cast %36 : vector<2x8xf32> to vector<2x8x1xf32>
    %38 = tpu.reciprocal %37 {approx = true} : vector<2x8x1xf32> -> vector<2x8x1xf32>
    %39 = vector.broadcast %38 : vector<2x8x1xf32> to vector<2x8x8xf32>
    %40 = arith.mulf %35, %39 : vector<2x8x8xf32>
    %41 = arith.truncf %40 : vector<2x8x8xf32> to vector<2x8x8xbf16>
    "tpu.trace_start"() <{level = 10 : i32, message = "bqk,bkd->bqd"}> : () -> ()
    %cst_15 = arith.constant dense<0.000000e+00> : vector<2x8x32xf32>
    %42 = tpu.matmul %41, %17, %cst_15 {dimension_numbers = #tpu.dot_dimension_numbers<[2], [1], [1], [2], [0, 0, 0, 1, 1, 2], [0], [0]>} : vector<2x8x8xbf16>, vector<2x8x32xbf16>, vector<2x8x32xf32> -> vector<2x8x32xf32>
    "tpu.trace_stop"() : () -> ()
    %43 = arith.addf %42, %3 : vector<2x8x32xf32>
    %cst_16 = arith.constant dense<0.000000e+00> : vector<2x8xf32>
    %44 = vector.multi_reduction <add>, %43, %cst_16 [2] : vector<2x8x32xf32> to vector<2x8xf32>
    %45 = vector.shape_cast %44 : vector<2x8xf32> to vector<2x8x1xf32>
    %cst_17 = arith.constant 3.200000e+01 : f32
    %46 = vector.broadcast %cst_17 : f32 to vector<2x8x1xf32>
    %47 = arith.divf %45, %46 : vector<2x8x1xf32>
    %48 = vector.broadcast %47 : vector<2x8x1xf32> to vector<2x8x32xf32>
    %49 = arith.subf %43, %48 : vector<2x8x32xf32>
    %50 = arith.mulf %49, %49 : vector<2x8x32xf32>
    %cst_18 = arith.constant dense<0.000000e+00> : vector<2x8xf32>
    %51 = vector.multi_reduction <add>, %50, %cst_18 [2] : vector<2x8x32xf32> to vector<2x8xf32>
    %52 = vector.shape_cast %51 : vector<2x8xf32> to vector<2x8x1xf32>
    %cst_19 = arith.constant 3.200000e+01 : f32
    %53 = vector.broadcast %cst_19 : f32 to vector<2x8x1xf32>
    %54 = arith.divf %52, %53 : vector<2x8x1xf32>
    %55 = vector.broadcast %47 : vector<2x8x1xf32> to vector<2x8x32xf32>
    %56 = arith.subf %43, %55 : vector<2x8x32xf32>
    %cst_20 = arith.constant 9.99999974E-6 : f32
    %57 = vector.broadcast %cst_20 : f32 to vector<2x8x1xf32>
    %58 = arith.addf %54, %57 : vector<2x8x1xf32>
    %59 = math.rsqrt %58 : vector<2x8x1xf32>
    %60 = vector.broadcast %59 : vector<2x8x1xf32> to vector<2x8x32xf32>
    %61 = arith.mulf %56, %60 : vector<2x8x32xf32>
    %62 = vector.shape_cast %13 : vector<1x32xf32> to vector<1x1x32xf32>
    %63 = vector.broadcast %62 : vector<1x1x32xf32> to vector<2x8x32xf32>
    %64 = arith.mulf %61, %63 : vector<2x8x32xf32>
    %65 = vector.shape_cast %14 : vector<1x32xf32> to vector<1x1x32xf32>
    %66 = vector.broadcast %65 : vector<1x1x32xf32> to vector<2x8x32xf32>
    %67 = arith.addf %64, %66 : vector<2x8x32xf32>
    %68 = vector.shape_cast %67 : vector<2x8x32xf32> to vector<16x32xf32>
    %69 = arith.truncf %68 : vector<16x32xf32> to vector<16x32xbf16>
    %cst_21 = arith.constant dense<0.000000e+00> : vector<16x32xf32>
    %70 = tpu.matmul %69, %10, %cst_21 {dimension_numbers = #tpu.dot_dimension_numbers<[1], [0], [0], [1], [0, 0, 1, 1], [], []>} : vector<16x32xbf16>, vector<32x32xbf16>, vector<16x32xf32> -> vector<16x32xf32>
    %71 = vector.broadcast %12 : vector<1x32xf32> to vector<16x32xf32>
    %72 = arith.addf %70, %71 : vector<16x32xf32>
    %cst_22 = arith.constant 0.000000e+00 : f32
    %73 = vector.broadcast %cst_22 : f32 to vector<16x32xf32>
    %74 = arith.maximumf %72, %73 : vector<16x32xf32>
    %75 = vector.shape_cast %74 : vector<16x32xf32> to vector<2x8x32xf32>
    %76 = arith.addf %75, %67 : vector<2x8x32xf32>
    %cst_23 = arith.constant dense<0.000000e+00> : vector<2x8xf32>
    %77 = vector.multi_reduction <add>, %76, %cst_23 [2] : vector<2x8x32xf32> to vector<2x8xf32>
    %78 = vector.shape_cast %77 : vector<2x8xf32> to vector<2x8x1xf32>
    %cst_24 = arith.constant 3.200000e+01 : f32
    %79 = vector.broadcast %cst_24 : f32 to vector<2x8x1xf32>
    %80 = arith.divf %78, %79 : vector<2x8x1xf32>
    %81 = vector.broadcast %80 : vector<2x8x1xf32> to vector<2x8x32xf32>
    %82 = arith.subf %76, %81 : vector<2x8x32xf32>
    %83 = arith.mulf %82, %82 : vector<2x8x32xf32>
    %cst_25 = arith.constant dense<0.000000e+00> : vector<2x8xf32>
    %84 = vector.multi_reduction <add>, %83, %cst_25 [2] : vector<2x8x32xf32> to vector<2x8xf32>
    %85 = vector.shape_cast %84 : vector<2x8xf32> to vector<2x8x1xf32>
    %cst_26 = arith.constant 3.200000e+01 : f32
    %86 = vector.broadcast %cst_26 : f32 to vector<2x8x1xf32>
    %87 = arith.divf %85, %86 : vector<2x8x1xf32>
    %88 = vector.broadcast %80 : vector<2x8x1xf32> to vector<2x8x32xf32>
    %89 = arith.subf %76, %88 : vector<2x8x32xf32>
    %cst_27 = arith.constant 9.99999974E-6 : f32
    %90 = vector.broadcast %cst_27 : f32 to vector<2x8x1xf32>
    %91 = arith.addf %87, %90 : vector<2x8x1xf32>
    %92 = math.rsqrt %91 : vector<2x8x1xf32>
    %93 = vector.broadcast %92 : vector<2x8x1xf32> to vector<2x8x32xf32>
    %94 = arith.mulf %89, %93 : vector<2x8x32xf32>
    %95 = vector.shape_cast %15 : vector<1x32xf32> to vector<1x1x32xf32>
    %96 = vector.broadcast %95 : vector<1x1x32xf32> to vector<2x8x32xf32>
    %97 = arith.mulf %94, %96 : vector<2x8x32xf32>
    %98 = vector.shape_cast %16 : vector<1x32xf32> to vector<1x1x32xf32>
    %99 = vector.broadcast %98 : vector<1x1x32xf32> to vector<2x8x32xf32>
    %100 = arith.addf %97, %99 : vector<2x8x32xf32>
    %c0_28 = arith.constant 0 : index
    %c0_29 = arith.constant 0 : index
    %c0_30 = arith.constant 0 : index
    %101 = vector.load %arg6[%c0_28, %c0_29, %c0_30] : memref<2x8x32xf32, #tpu.memory_space<vmem>>, vector<2x8x32xf32>
    tpu.vector_store %arg6[%c0_28, %c0_29, %c0_30], %100 {strides = array<i32>} : memref<2x8x32xf32, #tpu.memory_space<vmem>>, vector<2x8x32xf32>,
    return
  }
  func.func @transform_0(%arg0: i32, %arg1: i32) -> (i32, i32, i32) {
    %c0_i32 = arith.constant 0 : i32
    %c0_i32_0 = arith.constant 0 : i32
    %c0_i32_1 = arith.constant 0 : i32
    return %arg0, %c0_i32, %c0_i32_0 : i32, i32, i32
  }
  func.func @transform_1(%arg0: i32, %arg1: i32) -> (i32, i32, i32) {
    %c0_i32 = arith.constant 0 : i32
    %c0_i32_0 = arith.constant 0 : i32
    %c0_i32_1 = arith.constant 0 : i32
    return %arg0, %c0_i32, %c0_i32_0 : i32, i32, i32
  }
  func.func @transform_2(%arg0: i32, %arg1: i32) -> (i32, i32, i32) {
    %c0_i32 = arith.constant 0 : i32
    %c0_i32_0 = arith.constant 0 : i32
    %c0_i32_1 = arith.constant 0 : i32
    return %arg1, %c0_i32, %c0_i32_0 : i32, i32, i32
  }
  func.func @transform_3(%arg0: i32, %arg1: i32) -> (i32, i32, i32) {
    %c0_i32 = arith.constant 0 : i32
    %c0_i32_0 = arith.constant 0 : i32
    %c0_i32_1 = arith.constant 0 : i32
    return %arg1, %c0_i32, %c0_i32_0 : i32, i32, i32
  }
  func.func @transform_4(%arg0: i32, %arg1: i32) -> (i32, i32, i32) {
    %c0_i32 = arith.constant 0 : i32
    %c0_i32_0 = arith.constant 0 : i32
    %c0_i32_1 = arith.constant 0 : i32
    return %arg0, %c0_i32, %c0_i32_0 : i32, i32, i32
  }
}

module attributes {stable_mosaic.version = 11 : i64} {
  func.func @decoder_stack_kernel(%arg0: i32, %arg1: i32, %arg2: memref<2x8x32xf32, #tpu.memory_space<vmem>>, %arg3: memref<2x8x32xbf16, #tpu.memory_space<vmem>>, %arg4: memref<2x1x8xf32, #tpu.memory_space<vmem>>, %arg5: memref<2x1x8xf32, #tpu.memory_space<vmem>>, %arg6: memref<1x32x96xbf16, #tpu.memory_space<vmem>>, %arg7: memref<1x1x288xf32, #tpu.memory_space<vmem>>, %arg8: memref<2x8x32xf32, #tpu.memory_space<vmem>>) attributes {dimension_semantics = [#tpu.dimension_semantics<parallel>, #tpu.dimension_semantics<arbitrary>], iteration_bounds = array<i64: 1, 2>, scalar_prefetch = 0 : i64, scratch_operands = 0 : i64, tpu.core_type = #tpu.core_type<tc>, window_params = [{transform_indices = @transform_0, window_bounds = array<i64: 2, 8, 32>}, {transform_indices = @transform_1, window_bounds = array<i64: 2, 8, 32>}, {transform_indices = @transform_2, window_bounds = array<i64: 2, 1, 8>}, {transform_indices = @transform_3, window_bounds = array<i64: 2, 1, 8>}, {transform_indices = @transform_4, window_bounds = array<i64: 1, 32, 96>}, {transform_indices = @transform_5, window_bounds = array<i64: 1, 1, 288>}, {transform_indices = @transform_6, window_bounds = array<i64: 2, 8, 32>}]} {
    %c0_i32 = arith.constant 0 : i32
    %0 = arith.cmpi eq, %arg1, %c0_i32 : i32
    %1 = arith.extui %0 : i1 to i32
    %c0_i32_0 = arith.constant 0 : i32
    %2 = arith.cmpi ne, %1, %c0_i32_0 : i32
    scf.if %2 {
      %c0_50 = arith.constant 0 : index
      %c0_51 = arith.constant 0 : index
      %c0_52 = arith.constant 0 : index
      %174 = vector.load %arg2[%c0_50, %c0_51, %c0_52] : memref<2x8x32xf32, #tpu.memory_space<vmem>>, vector<2x8x32xf32>
      %c0_53 = arith.constant 0 : index
      %c0_54 = arith.constant 0 : index
      %c0_55 = arith.constant 0 : index
      %175 = vector.load %arg8[%c0_53, %c0_54, %c0_55] : memref<2x8x32xf32, #tpu.memory_space<vmem>>, vector<2x8x32xf32>
      tpu.vector_store %arg8[%c0_53, %c0_54, %c0_55], %174 {strides = array<i32>} : memref<2x8x32xf32, #tpu.memory_space<vmem>>, vector<2x8x32xf32>,
    } else {
    }
    %c0 = arith.constant 0 : index
    %c0_1 = arith.constant 0 : index
    %c0_2 = arith.constant 0 : index
    %3 = vector.load %arg8[%c0, %c0_1, %c0_2] : memref<2x8x32xf32, #tpu.memory_space<vmem>>, vector<2x8x32xf32>
    %c0_3 = arith.constant 0 : index
    %c0_4 = arith.constant 0 : index
    %c0_5 = arith.constant 0 : index
    %4 = vector.load %arg3[%c0_3, %c0_4, %c0_5] : memref<2x8x32xbf16, #tpu.memory_space<vmem>>, vector<2x8x32xbf16>
    %c0_6 = arith.constant 0 : index
    %c0_7 = arith.constant 0 : index
    %c0_8 = arith.constant 0 : index
    %5 = vector.load %arg5[%c0_6, %c0_7, %c0_8] : memref<2x1x8xf32, #tpu.memory_space<vmem>>, vector<2x1x8xf32>
    %c0_9 = arith.constant 0 : index
    %c0_10 = arith.constant 0 : index
    %c0_11 = arith.constant 0 : index
    %6 = vector.load %arg6[%c0_9, %c0_10, %c0_11] : memref<1x32x96xbf16, #tpu.memory_space<vmem>>, vector<1x32x96xbf16>
    %7 = vector.shape_cast %6 : vector<1x32x96xbf16> to vector<32x96xbf16>
    %c0_12 = arith.constant 0 : index
    %c0_13 = arith.constant 0 : index
    %c0_14 = arith.constant 0 : index
    %8 = vector.load %arg7[%c0_12, %c0_13, %c0_14] : memref<1x1x288xf32, #tpu.memory_space<vmem>>, vector<1x1x288xf32>
    %9 = vector.shape_cast %8 : vector<1x1x288xf32> to vector<1x288xf32>
    %10 = vector.extract_strided_slice %7 {offsets = [0, 0], sizes = [32, 32], strides = [1, 1]} : vector<32x96xbf16> to vector<32x32xbf16>
    %11 = vector.extract_strided_slice %7 {offsets = [0, 32], sizes = [32, 32], strides = [1, 1]} : vector<32x96xbf16> to vector<32x32xbf16>
    %12 = vector.extract_strided_slice %7 {offsets = [0, 64], sizes = [32, 32], strides = [1, 1]} : vector<32x96xbf16> to vector<32x32xbf16>
    %13 = vector.extract_strided_slice %9 {offsets = [0, 0], sizes = [1, 32], strides = [1, 1]} : vector<1x288xf32> to vector<1x32xf32>
    %14 = vector.extract_strided_slice %9 {offsets = [0, 32], sizes = [1, 32], strides = [1, 1]} : vector<1x288xf32> to vector<1x32xf32>
    %15 = vector.extract_strided_slice %9 {offsets = [0, 64], sizes = [1, 32], strides = [1, 1]} : vector<1x288xf32> to vector<1x32xf32>
    %16 = vector.extract_strided_slice %9 {offsets = [0, 96], sizes = [1, 32], strides = [1, 1]} : vector<1x288xf32> to vector<1x32xf32>
    %17 = vector.extract_strided_slice %9 {offsets = [0, 128], sizes = [1, 32], strides = [1, 1]} : vector<1x288xf32> to vector<1x32xf32>
    %18 = vector.extract_strided_slice %9 {offsets = [0, 160], sizes = [1, 32], strides = [1, 1]} : vector<1x288xf32> to vector<1x32xf32>
    %19 = vector.extract_strided_slice %9 {offsets = [0, 192], sizes = [1, 32], strides = [1, 1]} : vector<1x288xf32> to vector<1x32xf32>
    %20 = vector.extract_strided_slice %9 {offsets = [0, 224], sizes = [1, 32], strides = [1, 1]} : vector<1x288xf32> to vector<1x32xf32>
    %21 = vector.extract_strided_slice %9 {offsets = [0, 256], sizes = [1, 32], strides = [1, 1]} : vector<1x288xf32> to vector<1x32xf32>
    %22 = tpu.iota {dimensions = array<i32: 0>} : vector<8x8xi32>
    %23 = tpu.iota {dimensions = array<i32: 1>} : vector<8x8xi32>
    %24 = arith.cmpi sgt, %23, %22 : vector<8x8xi32>
    %cst = arith.constant -1.000000e+09 : f32
    %cst_15 = arith.constant 0.000000e+00 : f32
    %25 = vector.broadcast %cst : f32 to vector<8x8xf32>
    %26 = vector.broadcast %cst_15 : f32 to vector<8x8xf32>
    %27 = arith.select %24, %25, %26 : vector<8x8xi1>, vector<8x8xf32>
    %c0_16 = arith.constant 0 : index
    %c0_17 = arith.constant 0 : index
    %c0_18 = arith.constant 0 : index
    %28 = vector.load %arg4[%c0_16, %c0_17, %c0_18] : memref<2x1x8xf32, #tpu.memory_space<vmem>>, vector<2x1x8xf32>
    %29 = vector.shape_cast %27 : vector<8x8xf32> to vector<1x8x8xf32>
    %30 = vector.broadcast %28 : vector<2x1x8xf32> to vector<2x8x8xf32>
    %31 = vector.broadcast %29 : vector<1x8x8xf32> to vector<2x8x8xf32>
    %32 = arith.addf %30, %31 : vector<2x8x8xf32>
    %33 = arith.truncf %3 : vector<2x8x32xf32> to vector<2x8x32xbf16>
    %34 = vector.shape_cast %33 : vector<2x8x32xbf16> to vector<16x32xbf16>
    %cst_19 = arith.constant dense<0.000000e+00> : vector<16x32xf32>
    %35 = tpu.matmul %34, %10, %cst_19 {dimension_numbers = #tpu.dot_dimension_numbers<[1], [0], [0], [1], [0, 0, 1, 1], [], []>} : vector<16x32xbf16>, vector<32x32xbf16>, vector<16x32xf32> -> vector<16x32xf32>
    %36 = vector.broadcast %13 : vector<1x32xf32> to vector<16x32xf32>
    %37 = arith.addf %35, %36 : vector<16x32xf32>
    %38 = vector.extract_strided_slice %37 {offsets = [0, 0], sizes = [16, 16], strides = [1, 1]} : vector<16x32xf32> to vector<16x16xf32>
    %39 = vector.shape_cast %38 : vector<16x16xf32> to vector<2x8x16xf32>
    %40 = vector.extract_strided_slice %37 {offsets = [0, 16], sizes = [16, 16], strides = [1, 1]} : vector<16x32xf32> to vector<16x16xf32>
    %41 = vector.shape_cast %40 : vector<16x16xf32> to vector<2x8x16xf32>
    %42 = arith.truncf %39 : vector<2x8x16xf32> to vector<2x8x16xbf16>
    %43 = arith.truncf %41 : vector<2x8x16xf32> to vector<2x8x16xbf16>
    "tpu.trace_start"() <{level = 10 : i32, message = "bqd,bkd->bqk"}> : () -> ()
    %cst_20 = arith.constant dense<0.000000e+00> : vector<2x8x8xf32>
    %44 = tpu.matmul %42, %43, %cst_20 {dimension_numbers = #tpu.dot_dimension_numbers<[2], [2], [1], [1], [0, 0, 0, 1, 1, 1], [0], [0]>} : vector<2x8x16xbf16>, vector<2x8x16xbf16>, vector<2x8x8xf32> -> vector<2x8x8xf32>
    "tpu.trace_stop"() : () -> ()
    %45 = arith.addf %44, %32 : vector<2x8x8xf32>
    %cst_21 = arith.constant dense<0xFF800000> : vector<2x8xf32>
    %46 = vector.multi_reduction <maximumf>, %45, %cst_21 [2] : vector<2x8x8xf32> to vector<2x8xf32>
    %47 = vector.shape_cast %46 : vector<2x8xf32> to vector<2x8x1xf32>
    %48 = vector.broadcast %47 : vector<2x8x1xf32> to vector<2x8x8xf32>
    %49 = arith.subf %45, %48 : vector<2x8x8xf32>
    %50 = math.exp %49 : vector<2x8x8xf32>
    %cst_22 = arith.constant dense<0.000000e+00> : vector<2x8xf32>
    %51 = vector.multi_reduction <add>, %50, %cst_22 [2] : vector<2x8x8xf32> to vector<2x8xf32>
    %52 = vector.shape_cast %51 : vector<2x8xf32> to vector<2x8x1xf32>
    %53 = tpu.reciprocal %52 {approx = true} : vector<2x8x1xf32> -> vector<2x8x1xf32>
    %54 = vector.broadcast %53 : vector<2x8x1xf32> to vector<2x8x8xf32>
    %55 = arith.mulf %50, %54 : vector<2x8x8xf32>
    %56 = arith.truncf %55 : vector<2x8x8xf32> to vector<2x8x8xbf16>
    "tpu.trace_start"() <{level = 10 : i32, message = "bqk,bkd->bqd"}> : () -> ()
    %cst_23 = arith.constant dense<0.000000e+00> : vector<2x8x32xf32>
    %57 = tpu.matmul %56, %33, %cst_23 {dimension_numbers = #tpu.dot_dimension_numbers<[2], [1], [1], [2], [0, 0, 0, 1, 1, 2], [0], [0]>} : vector<2x8x8xbf16>, vector<2x8x32xbf16>, vector<2x8x32xf32> -> vector<2x8x32xf32>
    "tpu.trace_stop"() : () -> ()
    %58 = arith.addf %57, %3 : vector<2x8x32xf32>
    %cst_24 = arith.constant dense<0.000000e+00> : vector<2x8xf32>
    %59 = vector.multi_reduction <add>, %58, %cst_24 [2] : vector<2x8x32xf32> to vector<2x8xf32>
    %60 = vector.shape_cast %59 : vector<2x8xf32> to vector<2x8x1xf32>
    %cst_25 = arith.constant 3.200000e+01 : f32
    %61 = vector.broadcast %cst_25 : f32 to vector<2x8x1xf32>
    %62 = arith.divf %60, %61 : vector<2x8x1xf32>
    %63 = vector.broadcast %62 : vector<2x8x1xf32> to vector<2x8x32xf32>
    %64 = arith.subf %58, %63 : vector<2x8x32xf32>
    %65 = arith.mulf %64, %64 : vector<2x8x32xf32>
    %cst_26 = arith.constant dense<0.000000e+00> : vector<2x8xf32>
    %66 = vector.multi_reduction <add>, %65, %cst_26 [2] : vector<2x8x32xf32> to vector<2x8xf32>
    %67 = vector.shape_cast %66 : vector<2x8xf32> to vector<2x8x1xf32>
    %cst_27 = arith.constant 3.200000e+01 : f32
    %68 = vector.broadcast %cst_27 : f32 to vector<2x8x1xf32>
    %69 = arith.divf %67, %68 : vector<2x8x1xf32>
    %70 = vector.broadcast %62 : vector<2x8x1xf32> to vector<2x8x32xf32>
    %71 = arith.subf %58, %70 : vector<2x8x32xf32>
    %cst_28 = arith.constant 9.99999974E-6 : f32
    %72 = vector.broadcast %cst_28 : f32 to vector<2x8x1xf32>
    %73 = arith.addf %69, %72 : vector<2x8x1xf32>
    %74 = math.rsqrt %73 : vector<2x8x1xf32>
    %75 = vector.broadcast %74 : vector<2x8x1xf32> to vector<2x8x32xf32>
    %76 = arith.mulf %71, %75 : vector<2x8x32xf32>
    %77 = vector.shape_cast %16 : vector<1x32xf32> to vector<1x1x32xf32>
    %78 = vector.broadcast %77 : vector<1x1x32xf32> to vector<2x8x32xf32>
    %79 = arith.mulf %76, %78 : vector<2x8x32xf32>
    %80 = vector.shape_cast %17 : vector<1x32xf32> to vector<1x1x32xf32>
    %81 = vector.broadcast %80 : vector<1x1x32xf32> to vector<2x8x32xf32>
    %82 = arith.addf %79, %81 : vector<2x8x32xf32>
    %83 = arith.truncf %82 : vector<2x8x32xf32> to vector<2x8x32xbf16>
    %84 = vector.shape_cast %83 : vector<2x8x32xbf16> to vector<16x32xbf16>
    %85 = vector.extract_strided_slice %11 {offsets = [0, 0], sizes = [32, 16], strides = [1, 1]} : vector<32x32xbf16> to vector<32x16xbf16>
    %86 = vector.extract_strided_slice %14 {offsets = [0, 0], sizes = [1, 16], strides = [1, 1]} : vector<1x32xf32> to vector<1x16xf32>
    %cst_29 = arith.constant dense<0.000000e+00> : vector<16x16xf32>
    %87 = tpu.matmul %84, %85, %cst_29 {dimension_numbers = #tpu.dot_dimension_numbers<[1], [0], [0], [1], [0, 0, 1, 1], [], []>} : vector<16x32xbf16>, vector<32x16xbf16>, vector<16x16xf32> -> vector<16x16xf32>
    %88 = vector.broadcast %86 : vector<1x16xf32> to vector<16x16xf32>
    %89 = arith.addf %87, %88 : vector<16x16xf32>
    %90 = vector.shape_cast %89 : vector<16x16xf32> to vector<2x8x16xf32>
    %91 = vector.shape_cast %4 : vector<2x8x32xbf16> to vector<16x32xbf16>
    %92 = vector.extract_strided_slice %11 {offsets = [0, 16], sizes = [32, 16], strides = [1, 1]} : vector<32x32xbf16> to vector<32x16xbf16>
    %93 = vector.extract_strided_slice %14 {offsets = [0, 16], sizes = [1, 16], strides = [1, 1]} : vector<1x32xf32> to vector<1x16xf32>
    %cst_30 = arith.constant dense<0.000000e+00> : vector<16x16xf32>
    %94 = tpu.matmul %91, %92, %cst_30 {dimension_numbers = #tpu.dot_dimension_numbers<[1], [0], [0], [1], [0, 0, 1, 1], [], []>} : vector<16x32xbf16>, vector<32x16xbf16>, vector<16x16xf32> -> vector<16x16xf32>
    %95 = vector.broadcast %93 : vector<1x16xf32> to vector<16x16xf32>
    %96 = arith.addf %94, %95 : vector<16x16xf32>
    %97 = vector.shape_cast %96 : vector<16x16xf32> to vector<2x8x16xf32>
    %98 = arith.truncf %90 : vector<2x8x16xf32> to vector<2x8x16xbf16>
    %99 = arith.truncf %97 : vector<2x8x16xf32> to vector<2x8x16xbf16>
    "tpu.trace_start"() <{level = 10 : i32, message = "bqd,bkd->bqk"}> : () -> ()
    %cst_31 = arith.constant dense<0.000000e+00> : vector<2x8x8xf32>
    %100 = tpu.matmul %98, %99, %cst_31 {dimension_numbers = #tpu.dot_dimension_numbers<[2], [2], [1], [1], [0, 0, 0, 1, 1, 1], [0], [0]>} : vector<2x8x16xbf16>, vector<2x8x16xbf16>, vector<2x8x8xf32> -> vector<2x8x8xf32>
    "tpu.trace_stop"() : () -> ()
    %101 = vector.broadcast %5 : vector<2x1x8xf32> to vector<2x8x8xf32>
    %102 = arith.addf %100, %101 : vector<2x8x8xf32>
    %cst_32 = arith.constant dense<0xFF800000> : vector<2x8xf32>
    %103 = vector.multi_reduction <maximumf>, %102, %cst_32 [2] : vector<2x8x8xf32> to vector<2x8xf32>
    %104 = vector.shape_cast %103 : vector<2x8xf32> to vector<2x8x1xf32>
    %105 = vector.broadcast %104 : vector<2x8x1xf32> to vector<2x8x8xf32>
    %106 = arith.subf %102, %105 : vector<2x8x8xf32>
    %107 = math.exp %106 : vector<2x8x8xf32>
    %cst_33 = arith.constant dense<0.000000e+00> : vector<2x8xf32>
    %108 = vector.multi_reduction <add>, %107, %cst_33 [2] : vector<2x8x8xf32> to vector<2x8xf32>
    %109 = vector.shape_cast %108 : vector<2x8xf32> to vector<2x8x1xf32>
    %110 = tpu.reciprocal %109 {approx = true} : vector<2x8x1xf32> -> vector<2x8x1xf32>
    %111 = vector.broadcast %110 : vector<2x8x1xf32> to vector<2x8x8xf32>
    %112 = arith.mulf %107, %111 : vector<2x8x8xf32>
    %113 = arith.truncf %112 : vector<2x8x8xf32> to vector<2x8x8xbf16>
    "tpu.trace_start"() <{level = 10 : i32, message = "bqk,bkd->bqd"}> : () -> ()
    %cst_34 = arith.constant dense<0.000000e+00> : vector<2x8x32xf32>
    %114 = tpu.matmul %113, %4, %cst_34 {dimension_numbers = #tpu.dot_dimension_numbers<[2], [1], [1], [2], [0, 0, 0, 1, 1, 2], [0], [0]>} : vector<2x8x8xbf16>, vector<2x8x32xbf16>, vector<2x8x32xf32> -> vector<2x8x32xf32>
    "tpu.trace_stop"() : () -> ()
    %115 = arith.addf %114, %82 : vector<2x8x32xf32>
    %cst_35 = arith.constant dense<0.000000e+00> : vector<2x8xf32>
    %116 = vector.multi_reduction <add>, %115, %cst_35 [2] : vector<2x8x32xf32> to vector<2x8xf32>
    %117 = vector.shape_cast %116 : vector<2x8xf32> to vector<2x8x1xf32>
    %cst_36 = arith.constant 3.200000e+01 : f32
    %118 = vector.broadcast %cst_36 : f32 to vector<2x8x1xf32>
    %119 = arith.divf %117, %118 : vector<2x8x1xf32>
    %120 = vector.broadcast %119 : vector<2x8x1xf32> to vector<2x8x32xf32>
    %121 = arith.subf %115, %120 : vector<2x8x32xf32>
    %122 = arith.mulf %121, %121 : vector<2x8x32xf32>
    %cst_37 = arith.constant dense<0.000000e+00> : vector<2x8xf32>
    %123 = vector.multi_reduction <add>, %122, %cst_37 [2] : vector<2x8x32xf32> to vector<2x8xf32>
    %124 = vector.shape_cast %123 : vector<2x8xf32> to vector<2x8x1xf32>
    %cst_38 = arith.constant 3.200000e+01 : f32
    %125 = vector.broadcast %cst_38 : f32 to vector<2x8x1xf32>
    %126 = arith.divf %124, %125 : vector<2x8x1xf32>
    %127 = vector.broadcast %119 : vector<2x8x1xf32> to vector<2x8x32xf32>
    %128 = arith.subf %115, %127 : vector<2x8x32xf32>
    %cst_39 = arith.constant 9.99999974E-6 : f32
    %129 = vector.broadcast %cst_39 : f32 to vector<2x8x1xf32>
    %130 = arith.addf %126, %129 : vector<2x8x1xf32>
    %131 = math.rsqrt %130 : vector<2x8x1xf32>
    %132 = vector.broadcast %131 : vector<2x8x1xf32> to vector<2x8x32xf32>
    %133 = arith.mulf %128, %132 : vector<2x8x32xf32>
    %134 = vector.shape_cast %18 : vector<1x32xf32> to vector<1x1x32xf32>
    %135 = vector.broadcast %134 : vector<1x1x32xf32> to vector<2x8x32xf32>
    %136 = arith.mulf %133, %135 : vector<2x8x32xf32>
    %137 = vector.shape_cast %19 : vector<1x32xf32> to vector<1x1x32xf32>
    %138 = vector.broadcast %137 : vector<1x1x32xf32> to vector<2x8x32xf32>
    %139 = arith.addf %136, %138 : vector<2x8x32xf32>
    %140 = vector.shape_cast %139 : vector<2x8x32xf32> to vector<16x32xf32>
    %141 = arith.truncf %140 : vector<16x32xf32> to vector<16x32xbf16>
    %cst_40 = arith.constant dense<0.000000e+00> : vector<16x32xf32>
    %142 = tpu.matmul %141, %12, %cst_40 {dimension_numbers = #tpu.dot_dimension_numbers<[1], [0], [0], [1], [0, 0, 1, 1], [], []>} : vector<16x32xbf16>, vector<32x32xbf16>, vector<16x32xf32> -> vector<16x32xf32>
    %143 = vector.broadcast %15 : vector<1x32xf32> to vector<16x32xf32>
    %144 = arith.addf %142, %143 : vector<16x32xf32>
    %cst_41 = arith.constant 0.000000e+00 : f32
    %145 = vector.broadcast %cst_41 : f32 to vector<16x32xf32>
    %146 = arith.maximumf %144, %145 : vector<16x32xf32>
    %147 = vector.shape_cast %146 : vector<16x32xf32> to vector<2x8x32xf32>
    %148 = arith.addf %147, %139 : vector<2x8x32xf32>
    %cst_42 = arith.constant dense<0.000000e+00> : vector<2x8xf32>
    %149 = vector.multi_reduction <add>, %148, %cst_42 [2] : vector<2x8x32xf32> to vector<2x8xf32>
    %150 = vector.shape_cast %149 : vector<2x8xf32> to vector<2x8x1xf32>
    %cst_43 = arith.constant 3.200000e+01 : f32
    %151 = vector.broadcast %cst_43 : f32 to vector<2x8x1xf32>
    %152 = arith.divf %150, %151 : vector<2x8x1xf32>
    %153 = vector.broadcast %152 : vector<2x8x1xf32> to vector<2x8x32xf32>
    %154 = arith.subf %148, %153 : vector<2x8x32xf32>
    %155 = arith.mulf %154, %154 : vector<2x8x32xf32>
    %cst_44 = arith.constant dense<0.000000e+00> : vector<2x8xf32>
    %156 = vector.multi_reduction <add>, %155, %cst_44 [2] : vector<2x8x32xf32> to vector<2x8xf32>
    %157 = vector.shape_cast %156 : vector<2x8xf32> to vector<2x8x1xf32>
    %cst_45 = arith.constant 3.200000e+01 : f32
    %158 = vector.broadcast %cst_45 : f32 to vector<2x8x1xf32>
    %159 = arith.divf %157, %158 : vector<2x8x1xf32>
    %160 = vector.broadcast %152 : vector<2x8x1xf32> to vector<2x8x32xf32>
    %161 = arith.subf %148, %160 : vector<2x8x32xf32>
    %cst_46 = arith.constant 9.99999974E-6 : f32
    %162 = vector.broadcast %cst_46 : f32 to vector<2x8x1xf32>
    %163 = arith.addf %159, %162 : vector<2x8x1xf32>
    %164 = math.rsqrt %163 : vector<2x8x1xf32>
    %165 = vector.broadcast %164 : vector<2x8x1xf32> to vector<2x8x32xf32>
    %166 = arith.mulf %161, %165 : vector<2x8x32xf32>
    %167 = vector.shape_cast %20 : vector<1x32xf32> to vector<1x1x32xf32>
    %168 = vector.broadcast %167 : vector<1x1x32xf32> to vector<2x8x32xf32>
    %169 = arith.mulf %166, %168 : vector<2x8x32xf32>
    %170 = vector.shape_cast %21 : vector<1x32xf32> to vector<1x1x32xf32>
    %171 = vector.broadcast %170 : vector<1x1x32xf32> to vector<2x8x32xf32>
    %172 = arith.addf %169, %171 : vector<2x8x32xf32>
    %c0_47 = arith.constant 0 : index
    %c0_48 = arith.constant 0 : index
    %c0_49 = arith.constant 0 : index
    %173 = vector.load %arg8[%c0_47, %c0_48, %c0_49] : memref<2x8x32xf32, #tpu.memory_space<vmem>>, vector<2x8x32xf32>
    tpu.vector_store %arg8[%c0_47, %c0_48, %c0_49], %172 {strides = array<i32>} : memref<2x8x32xf32, #tpu.memory_space<vmem>>, vector<2x8x32xf32>,
    return
  }
  func.func @transform_0(%arg0: i32, %arg1: i32) -> (i32, i32, i32) {
    %c0_i32 = arith.constant 0 : i32
    %c0_i32_0 = arith.constant 0 : i32
    %c0_i32_1 = arith.constant 0 : i32
    return %arg0, %c0_i32, %c0_i32_0 : i32, i32, i32
  }
  func.func @transform_1(%arg0: i32, %arg1: i32) -> (i32, i32, i32) {
    %c0_i32 = arith.constant 0 : i32
    %c0_i32_0 = arith.constant 0 : i32
    %c0_i32_1 = arith.constant 0 : i32
    return %arg0, %c0_i32, %c0_i32_0 : i32, i32, i32
  }
  func.func @transform_2(%arg0: i32, %arg1: i32) -> (i32, i32, i32) {
    %c0_i32 = arith.constant 0 : i32
    %c0_i32_0 = arith.constant 0 : i32
    %c0_i32_1 = arith.constant 0 : i32
    return %arg0, %c0_i32, %c0_i32_0 : i32, i32, i32
  }
  func.func @transform_3(%arg0: i32, %arg1: i32) -> (i32, i32, i32) {
    %c0_i32 = arith.constant 0 : i32
    %c0_i32_0 = arith.constant 0 : i32
    %c0_i32_1 = arith.constant 0 : i32
    return %arg0, %c0_i32, %c0_i32_0 : i32, i32, i32
  }
  func.func @transform_4(%arg0: i32, %arg1: i32) -> (i32, i32, i32) {
    %c0_i32 = arith.constant 0 : i32
    %c0_i32_0 = arith.constant 0 : i32
    %c0_i32_1 = arith.constant 0 : i32
    return %arg1, %c0_i32, %c0_i32_0 : i32, i32, i32
  }
  func.func @transform_5(%arg0: i32, %arg1: i32) -> (i32, i32, i32) {
    %c0_i32 = arith.constant 0 : i32
    %c0_i32_0 = arith.constant 0 : i32
    %c0_i32_1 = arith.constant 0 : i32
    return %arg1, %c0_i32, %c0_i32_0 : i32, i32, i32
  }
  func.func @transform_6(%arg0: i32, %arg1: i32) -> (i32, i32, i32) {
    %c0_i32 = arith.constant 0 : i32
    %c0_i32_0 = arith.constant 0 : i32
    %c0_i32_1 = arith.constant 0 : i32
    return %arg0, %c0_i32, %c0_i32_0 : i32, i32, i32
  }
}

</mosaic_0001>

<llo_original>
// kernel: encoder_decoder_forward.2
$region0: #{encoder_decoder_forward.2}
  #allocation0 [shape = 'u32[]', space=smem, size = 0x4, offset = 0x4, fixed_abs, tag = 'smem constant byte address 0x4 - core index']
  #allocation1 [shape = 'u32[72,128]{1,0:T(1,128)}', space=vmem, size = 0x9000, scoped, tag = 'internal scratch']
  %s0 = inlined_call_operand.vmem [shape: f32[2,8,32], index: 0, kind: input, shape index: {}]
  %s1 = inlined_call_operand.vmem [shape: f32[2,1,8], index: 1, kind: input, shape index: {}]
  %s2 = inlined_call_operand.vmem [shape: bf16[2,32,64], index: 2, kind: input, shape index: {}]
  %s3 = inlined_call_operand.vmem [shape: f32[2,1,192], index: 3, kind: input, shape index: {}]
  %s4 = inlined_call_operand.vmem [shape: f32[2,8,32], index: 4, kind: output, shape index: {}]
  %s5 = sld [smem:[#allocation0]]
  $region53: #{encoder_decoder_forward.2} parent=0
    _
  %s7 = ssub.s32 1, %s5
  %s8 = scalar_select 0, %s7, %s5
  loop: start=0, step=1, limit=4
  $region2: #{encoder_decoder_forward.2} parent=0 // loop_pre_header
    _
  $region3: #{encoder_decoder_forward.2} parent=0 // loop_header
    %s10 = sphi 0, %s14
    %p11 = scmp.ge.s32.totalorder %s10, 4
    %s17 = sphi 0, %s29
    %s18 = sphi 0, %s25
    %s19 = sphi 0, %s17
    %s20 = sphi 0, %s18
    %s21 = sphi 0, %s19
    %s22 = sphi 0, %s20
    %s32 = sphi 0, %s34
    %s35 = sphi 0, %s32
    %s36 = sphi 0, %s35
    %s52 = sphi 0, %s36
    %s58 = sphi 0, %s60
    %s61 = sphi 0, %s58
    %s62 = sphi 0, %s61
    %s78 = sphi 0, %s62
    %s84 = sphi 0, %s86
    %s87 = sphi 0, %s84
    %s88 = sphi 0, %s87
    %s104 = sphi 0, %s88
    %s110 = sphi 0, %s112
    %s113 = sphi 0, %s110
    %s114 = sphi 0, %s113
    %s130 = sphi 0, %s114
    %s136 = sphi 0, %s138
    %s139 = sphi 0, %s136
    %s140 = sphi 0, %s139
    %s156 = sphi 0, %s140
  $region4: #{encoder_decoder_forward.2} parent=0 // loop_header_branch
    %13 = sbr.rel (%p11) target = $region8
  $region5: #{encoder_decoder_forward.2} parent=0 // loop_body
    %s15 = ssub.s32 %s10, 1
    %s16 = ssub.s32 %s10, 2
    %s23 = sadd.s32 1, %s18
    %p24 = scmp.ge.s32.totalorder %s23, 2
    %s25 = scalar_select %p24, 0, %s23
    %s26 = sadd.s32 1, %s17
    %s27 = scalar_select %p24, %s26, %s17
    %p28 = scmp.ge.s32.totalorder %s27, 1
    %s29 = scalar_select %p28, 0, %s27
    %s30 = ssub.s32 %s17, %s29
    %p31 = scmp.eq.s32.totalorder %s30, 0
    %s33 = sadd.s32 %s32, 1
    %s34 = scalar_select %p31, %s32, %s33
    %p37 = pneg %p31
    %p38 = scmp.eq.s32.totalorder %s10, 1
    %p39 = por %p37, %p38
    %p40 = scmp.ne.s32.totalorder %s32, %s35
    %p41 = scmp.eq.s32.totalorder %s10, 0
    %p42 = por %p40, %p41
    %p43 = scmp.ne.s32.totalorder %s32, %s35
    %p44 = scmp.eq.s32.totalorder %s15, 1
    %p45 = por %p43, %p44
    %p46 = scmp.ne.s32.totalorder %s35, %s36
    %p47 = scmp.eq.s32.totalorder %s15, 0
    %p48 = por %p46, %p47
    %p49 = scmp.ne.s32.totalorder %s35, %s36
    %p50 = scmp.eq.s32.totalorder %s16, 1
    %p51 = por %p49, %p50
    %p53 = scmp.ne.s32.totalorder %s36, %s52
    %p54 = scmp.eq.s32.totalorder %s16, 0
    %p55 = por %p53, %p54
    %s56 = ssub.s32 %s17, %s29
    %p57 = scmp.eq.s32.totalorder %s56, 0
    %s59 = sadd.s32 %s58, 1
    %s60 = scalar_select %p57, %s58, %s59
    %p63 = pneg %p57
    %p64 = scmp.eq.s32.totalorder %s10, 1
    %p65 = por %p63, %p64
    %p66 = scmp.ne.s32.totalorder %s58, %s61
    %p67 = scmp.eq.s32.totalorder %s10, 0
    %p68 = por %p66, %p67
    %p69 = scmp.ne.s32.totalorder %s58, %s61
    %p70 = scmp.eq.s32.totalorder %s15, 1
    %p71 = por %p69, %p70
    %p72 = scmp.ne.s32.totalorder %s61, %s62
    %p73 = scmp.eq.s32.totalorder %s15, 0
    %p74 = por %p72, %p73
    %p75 = scmp.ne.s32.totalorder %s61, %s62
    %p76 = scmp.eq.s32.totalorder %s16, 1
    %p77 = por %p75, %p76
    %p79 = scmp.ne.s32.totalorder %s62, %s78
    %p80 = scmp.eq.s32.totalorder %s16, 0
    %p81 = por %p79, %p80
    %s82 = ssub.s32 %s18, %s25
    %p83 = scmp.eq.s32.totalorder %s82, 0
    %s85 = sadd.s32 %s84, 1
    %s86 = scalar_select %p83, %s84, %s85
    %p89 = pneg %p83
    %p90 = scmp.eq.s32.totalorder %s10, 1
    %p91 = por %p89, %p90
    %p92 = scmp.ne.s32.totalorder %s84, %s87
    %p93 = scmp.eq.s32.totalorder %s10, 0
    %p94 = por %p92, %p93
    %p95 = scmp.ne.s32.totalorder %s84, %s87
    %p96 = scmp.eq.s32.totalorder %s15, 1
    %p97 = por %p95, %p96
    %p98 = scmp.ne.s32.totalorder %s87, %s88
    %p99 = scmp.eq.s32.totalorder %s15, 0
    %p100 = por %p98, %p99
    %p101 = scmp.ne.s32.totalorder %s87, %s88
    %p102 = scmp.eq.s32.totalorder %s16, 1
    %p103 = por %p101, %p102
    %p105 = scmp.ne.s32.totalorder %s88, %s104
    %p106 = scmp.eq.s32.totalorder %s16, 0
    %p107 = por %p105, %p106
    %s108 = ssub.s32 %s18, %s25
    %p109 = scmp.eq.s32.totalorder %s108, 0
    %s111 = sadd.s32 %s110, 1
    %s112 = scalar_select %p109, %s110, %s111
    %p115 = pneg %p109
    %p116 = scmp.eq.s32.totalorder %s10, 1
    %p117 = por %p115, %p116
    %p118 = scmp.ne.s32.totalorder %s110, %s113
    %p119 = scmp.eq.s32.totalorder %s10, 0
    %p120 = por %p118, %p119
    %p121 = scmp.ne.s32.totalorder %s110, %s113
    %p122 = scmp.eq.s32.totalorder %s15, 1
    %p123 = por %p121, %p122
    %p124 = scmp.ne.s32.totalorder %s113, %s114
    %p125 = scmp.eq.s32.totalorder %s15, 0
    %p126 = por %p124, %p125
    %p127 = scmp.ne.s32.totalorder %s113, %s114
    %p128 = scmp.eq.s32.totalorder %s16, 1
    %p129 = por %p127, %p128
    %p131 = scmp.ne.s32.totalorder %s114, %s130
    %p132 = scmp.eq.s32.totalorder %s16, 0
    %p133 = por %p131, %p132
    %s134 = ssub.s32 %s17, %s29
    %p135 = scmp.eq.s32.totalorder %s134, 0
    %s137 = sadd.s32 %s136, 1
    %s138 = scalar_select %p135, %s136, %s137
    %p141 = pneg %p135
    %p142 = scmp.eq.s32.totalorder %s10, 1
    %p143 = por %p141, %p142
    %p144 = scmp.ne.s32.totalorder %s136, %s139
    %p145 = scmp.eq.s32.totalorder %s10, 0
    %p146 = por %p144, %p145
    %p147 = scmp.ne.s32.totalorder %s136, %s139
    %p148 = scmp.eq.s32.totalorder %s15, 1
    %p149 = por %p147, %p148
    %p150 = scmp.ne.s32.totalorder %s139, %s140
    %p151 = scmp.eq.s32.totalorder %s15, 0
    %p152 = por %p150, %p151
    %p153 = scmp.ne.s32.totalorder %s139, %s140
    %p154 = scmp.eq.s32.totalorder %s16, 1
    %p155 = por %p153, %p154
    %p157 = scmp.ne.s32.totalorder %s140, %s156
    %p158 = scmp.eq.s32.totalorder %s16, 0
    %p159 = por %p157, %p158
    %p160 = scmp.le.s32.totalorder 1, %s10
    %p161 = scmp.lt.s32.totalorder %s10, 3
    %p162 = pnand %p160, %p161
    %p163 = pneg %p162
    // Predicated region
    $region9: #{encoder_decoder_forward.2} parent=5 // pred_check
      _
    $region10: #{encoder_decoder_forward.2} parent=5 // pred_check_branch
      %165 = sbr.rel (%p162) target = $region12
    $region11: #{encoder_decoder_forward.2} parent=5 // pred_region
      %s166 = ssub.s32 %s10, 1
      // Predicated region
      $region13: #{encoder_decoder_forward.2} parent=11 // pred_check
        %p167 = pneg %p48
      $region14: #{encoder_decoder_forward.2} parent=11 // pred_check_branch
        %169 = sbr.rel (%p167) target = $region16
      $region15: #{encoder_decoder_forward.2} parent=11 // pred_region
        %s170 = smul.u32 2, %s19
        %p171 = scmp.lt.s32.totalorder %s170, 1
        %s172 = scalar_select %p171, %s170, 1
        %s173 = smul.addr %s172, 8
        %s174 = scalar_lea.vmem %s0, %s173
        %s175 = smul.u32 2, %s19
      $region16: #{encoder_decoder_forward.2} parent=11 // pred_fallthru
        _
      // Predicated region
      $region17: #{encoder_decoder_forward.2} parent=11 // pred_check
        %p176 = pneg %p74
      $region18: #{encoder_decoder_forward.2} parent=11 // pred_check_branch
        %178 = sbr.rel (%p176) target = $region20
      $region19: #{encoder_decoder_forward.2} parent=11 // pred_region
        %s179 = smul.u32 2, %s19
        %p180 = scmp.lt.s32.totalorder %s179, 1
        %s181 = scalar_select %p180, %s179, 1
        %s182 = scalar_lea.vmem %s1, %s181
        %s183 = smul.u32 2, %s19
      $region20: #{encoder_decoder_forward.2} parent=11 // pred_fallthru
        _
    $region12: #{encoder_decoder_forward.2} parent=5 // pred_fallthru
      _
    %p184 = scmp.lt.s32.totalorder %s10, 2
    // Predicated region
    $region21: #{encoder_decoder_forward.2} parent=5 // pred_check
      %p185 = pneg %p184
    $region22: #{encoder_decoder_forward.2} parent=5 // pred_check_branch
      %187 = sbr.rel (%p185) target = $region24
    $region23: #{encoder_decoder_forward.2} parent=5 // pred_region
      // Predicated region
      $region25: #{encoder_decoder_forward.2} parent=23 // pred_check
        %p188 = pneg %p94
      $region26: #{encoder_decoder_forward.2} parent=23 // pred_check_branch
        %190 = sbr.rel (%p188) target = $region28
      $region27: #{encoder_decoder_forward.2} parent=23 // pred_region
        %p191 = scmp.lt.s32.totalorder %s18, 1
        %s192 = scalar_select %p191, %s18, 1
        %s193 = smul.addr %s192, 4
        %s194 = smul.addr %s193, 4
        %s195 = scalar_lea.vmem %s2, %s194
      $region28: #{encoder_decoder_forward.2} parent=23 // pred_fallthru
        _
      // Predicated region
      $region29: #{encoder_decoder_forward.2} parent=23 // pred_check
        %p196 = pneg %p120
      $region30: #{encoder_decoder_forward.2} parent=23 // pred_check_branch
        %198 = sbr.rel (%p196) target = $region32
      $region31: #{encoder_decoder_forward.2} parent=23 // pred_region
        %p199 = scmp.lt.s32.totalorder %s18, 1
        %s200 = scalar_select %p199, %s18, 1
        %s201 = smul.addr %s200, 2
        %s202 = scalar_lea.vmem %s3, %s201
      $region32: #{encoder_decoder_forward.2} parent=23 // pred_fallthru
        _
    $region24: #{encoder_decoder_forward.2} parent=5 // pred_fallthru
      _
    %p203 = scmp.le.s32.totalorder 1, %s10
    %p204 = scmp.lt.s32.totalorder %s10, 3
    %p205 = pnand %p203, %p204
    %p206 = pneg %p205
    // Predicated region
    $region33: #{encoder_decoder_forward.2} parent=5 // pred_check
      _
    $region34: #{encoder_decoder_forward.2} parent=5 // pred_check_branch
      %208 = sbr.rel (%p205) target = $region36
    $region35: #{encoder_decoder_forward.2} parent=5 // pred_region
      %s209 = ssub.s32 %s10, 1
      %s210 = smul.u32 2, %s19
      %p211 = scmp.lt.s32.totalorder %s210, 1
      %s212 = scalar_select %p211, %s210, 1
      %s213 = smul.addr %s212, 8
      %s214 = scalar_lea.vmem %s0, %s213
      %p215 = pneg %p48
      %p216 = pneg %p45
      %s217 = smul.u32 2, %s19
      %p218 = scmp.lt.s32.totalorder %s217, 1
      %s219 = scalar_select %p218, %s217, 1
      %s220 = scalar_lea.vmem %s1, %s219
      %p221 = pneg %p74
      %p222 = pneg %p71
      %p223 = scmp.lt.s32.totalorder %s20, 1
      %s224 = scalar_select %p223, %s20, 1
      %s225 = smul.addr %s224, 4
      %s226 = smul.addr %s225, 4
      %s227 = scalar_lea.vmem %s2, %s226
      %p228 = pneg %p100
      %p229 = pneg %p97
      %p230 = scmp.lt.s32.totalorder %s20, 1
      %s231 = scalar_select %p230, %s20, 1
      %s232 = smul.addr %s231, 2
      %s233 = scalar_lea.vmem %s3, %s232
      %p234 = pneg %p126
      %p235 = pneg %p123
      %p236 = pneg %p152
      %p237 = pneg %p149
      %s238 = smul.u32 2, %s19
      %p239 = scmp.lt.s32.totalorder %s238, 1
      %s240 = scalar_select %p239, %s238, 1
      %s241 = smul.addr %s240, 8
      %s242 = scalar_lea.vmem %s4, %s241
      %s243 = smul.u32 2, %s19
      %p244 = scmp.lt.s32.totalorder %s243, 1
      %s245 = scalar_select %p244, %s243, 1
      %s246 = smul.addr %s245, 8
      %s247 = scalar_lea.vmem %s0, %s246
      %s248 = smul.u32 2, %s19
      %s249 = smul.u32 2, %s19
      %p250 = scmp.lt.s32.totalorder %s249, 1
      %s251 = scalar_select %p250, %s249, 1
      %s252 = scalar_lea.vmem %s1, %s251
      %s253 = smul.u32 2, %s19
      %p254 = scmp.lt.s32.totalorder %s20, 1
      %s255 = scalar_select %p254, %s20, 1
      %s256 = smul.addr %s255, 4
      %s257 = smul.addr %s256, 4
      %s258 = scalar_lea.vmem %s2, %s257
      %p259 = scmp.lt.s32.totalorder %s20, 1
      %s260 = scalar_select %p259, %s20, 1
      %s261 = smul.addr %s260, 2
      %s262 = scalar_lea.vmem %s3, %s261
      %s263 = smul.u32 2, %s19
      %p264 = scmp.lt.s32.totalorder %s263, 1
      %s265 = scalar_select %p264, %s263, 1
      %s266 = smul.addr %s265, 8
      %s267 = scalar_lea.vmem %s4, %s266
      %s268 = smul.u32 2, %s19
      %p270 = scmp.eq.s32.totalorder %s20, 0
      // Predicated region
      $region37: #{encoder_decoder_forward.2} parent=35 // pred_check
        %p271 = pneg %p270
      $region38: #{encoder_decoder_forward.2} parent=35 // pred_check_branch
        %273 = sbr.rel (%p271) target = $region40
      $region39: #{encoder_decoder_forward.2} parent=35 // pred_region
        %v274 = vld [vmem:[%s247] sm:$0xff]
        %v275 = vld [vmem:[%s247 + $0x8] sm:$0xff]
        %vm276 = vcmask 261120
        %277 = vst.msk [vmem:[%s267] sm:$0xff] %vm276, %v274
        %278 = vst.msk [vmem:[%s267 + $0x8] sm:$0xff] %vm276, %v275
      $region40: #{encoder_decoder_forward.2} parent=35 // pred_fallthru
        _
      %v279 = vld [vmem:[%s267] sm:$0xff]
      %v280 = vld [vmem:[%s267 + $0x8] sm:$0xff]
      %v281 = vld [vmem:[%s252] sm:$0x1]
      %v282 = vld [vmem:[%s252 + $0x1] sm:$0x1]
      %v283 = vld [vmem:[%s258] sm:$0xf]
      %v284 = vld [vmem:[%s258 + $0x4] sm:$0xf]
      %v285 = vld [vmem:[%s258 + $0x8] sm:$0xf]
      %v286 = vld [vmem:[%s258 + $0xc] sm:$0xf]
      %v287 = vld [vmem:[%s262] sm:$0x3]
      %v288 = vpack.c.bf16 %v279, %v279
      %v289 = vpack.c.bf16 %v280, %v280
      %v291 = vperm.slane %v287, 0
      %v295 = vunpack.c.l.b16 %v288
      %v296 = vunpack.c.l.b16 %v289
      %v297 = vpack.c.b16 %v296, %v295
      %v302 = vunpack.c.l.b16 %v283
      %v303 = vunpack.c.l.b16 %v284
      %v304 = vunpack.c.l.b16 %v285
      %v305 = vunpack.c.l.b16 %v286
      %v306 = vpack.c.b16 %v303, %v302
      %v307 = vpack.c.b16 %v305, %v304
      %vm310 = vcmask 261120
      %v312 = vsel %vm310, %v297, 0
      %314 = vmatpush.bf16.msra.mxu0 0
      %315 = vmatpush.bf16.msra.mxu0 0
      %316 = vmatpush.bf16.msra.mxu0 0
      %317 = vmatpush.bf16.msra.mxu0 0
      %318 = vmatpush.bf16.msra.mxu0 0
      %319 = vmatpush.bf16.msra.mxu0 0
      %320 = vmatpush.bf16.msra.mxu0 %v307
      %321 = vmatpush.bf16.msra.mxu0 %v306
      %322 = vmatmul.bf16.gmra.mxu0 %v312
      %v323 = vpop.f32.mrf.mxu0
      %v324 = vadd.f32 %v291, %v323
      %v325 = vpop.f32.mrf.mxu0
      %v326 = vadd.f32 %v291, %v325
      %327 = vdwg.mxu0
      %v328 = vpack.c.bf16 %v324, %v324
      %v329 = vpack.c.bf16 %v326, %v326
      %v332 = vperm.slane %v281, 0
      %v333 = vperm.slane %v282, 0
      %v337 = vunpack.c.l.b16 %v328
      %v338 = vpack.c.b16 %v337, %v337
      %339 = vrot.lane.b32.xlu0 %v338, 112
      %v340 = vpop.permute.xlu0 %339
      %vm341 = vcmask 130048
      %v343 = vsel %vm341, %v328, 0
      %v346 = vsel %vm341, %v340, 0
      %348 = vmatpush.bf16.xpose.msra.mxu0 0
      %349 = vmatpush.bf16.xpose.msra.mxu0 0
      %350 = vmatpush.bf16.xpose.msra.mxu0 0
      %351 = vmatpush.bf16.xpose.msra.mxu0 0
      %352 = vmatpush.bf16.xpose.msra.mxu0 0
      %353 = vmatpush.bf16.xpose.msra.mxu0 0
      %354 = vmatpush.bf16.xpose.msra.mxu0 0
      %355 = vmatpush.bf16.xpose.msra.mxu0 %v346
      %356 = vmatmul.bf16.gmra.mxu0 %v343
      %v357 = vpop.f32.mrf.mxu0
      %v358 = vadd.f32 %v332, %v357
      %v359 = vpop.f32.mrf.mxu0
      %360 = vdwg.mxu0
      %v362 = vunpack.c.l.b16 %v329
      %v363 = vpack.c.b16 %v362, %v362
      %364 = vrot.lane.b32.xlu0 %v363, 112
      %v365 = vpop.permute.xlu0 %364
      %v367 = vsel %vm341, %v329, 0
      %v370 = vsel %vm341, %v365, 0
      %372 = vmatpush.bf16.xpose.msra.mxu0 0
      %373 = vmatpush.bf16.xpose.msra.mxu0 0
      %374 = vmatpush.bf16.xpose.msra.mxu0 0
      %375 = vmatpush.bf16.xpose.msra.mxu0 0
      %376 = vmatpush.bf16.xpose.msra.mxu0 0
      %377 = vmatpush.bf16.xpose.msra.mxu0 0
      %378 = vmatpush.bf16.xpose.msra.mxu0 0
      %379 = vmatpush.bf16.xpose.msra.mxu0 %v370
      %380 = vmatmul.bf16.gmra.mxu0 %v367
      %v381 = vpop.f32.mrf.mxu0
      %v382 = vadd.f32 %v333, %v381
      %v383 = vpop.f32.mrf.mxu0
      %384 = vdwg.mxu0
      %vm385 = vcmask 64512
      %v386 = vsel %vm385, %v358, -inf
      %387 = vmax.xlane.f32.xlu0 %v386
      %v388 = vpop.xlane.xlu0 %387
      %v389 = vsel %vm385, %v382, -inf
      %390 = vmax.xlane.f32.xlu0 %v389
      %v391 = vpop.xlane.xlu0 %390
      %v392 = vsub.f32 %v358, %v388
      %v393 = vsub.f32 %v382, %v391
      %v394 = vmul.f32 %v392, 1.442695
      %v395 = vpow.pop %v394
      %v396 = vmul.f32 %v393, 1.442695
      %v397 = vpow.pop %v396
      %v398 = vsel %vm385, %v395, 0.0
      %399 = vadd.xlane.f32.xlu0 %v398
      %v400 = vpop.xlane.xlu0 %399
      %v401 = vsel %vm385, %v397, 0.0
      %402 = vadd.xlane.f32.xlu0 %v401
      %v403 = vpop.xlane.xlu0 %402
      %v404 = vrcp.pop %v400
      %v405 = vrcp.pop %v403
      %v406 = vmul.f32 %v395, %v404
      %v407 = vmul.f32 %v397, %v405
      %v408 = vpack.c.bf16 %v406, %v406
      %v409 = vpack.c.bf16 %v407, %v407
      %v411 = vsel %vm385, %v408, 0
      %vm413 = vcmask 1043456
      %v415 = vsel %vm413, %v288, 0
      %417 = vmatpush.bf16.msra.mxu0 0
      %418 = vmatpush.bf16.msra.mxu0 0
      %419 = vmatpush.bf16.msra.mxu0 0
      %420 = vmatpush.bf16.msra.mxu0 0
      %421 = vmatpush.bf16.msra.mxu0 0
      %422 = vmatpush.bf16.msra.mxu0 0
      %423 = vmatpush.bf16.msra.mxu0 0
      %424 = vmatpush.bf16.msra.mxu0 %v415
      %425 = vmatmul.bf16.gmra.mxu0 %v411
      %v426 = vpop.f32.mrf.mxu0
      %v427 = vadd.f32 %v279, %v426
      %v428 = vpop.f32.mrf.mxu0
      %429 = vdwg.mxu0
      %v431 = vsel %vm385, %v409, 0
      %v434 = vsel %vm413, %v289, 0
      %436 = vmatpush.bf16.msra.mxu0 0
      %437 = vmatpush.bf16.msra.mxu0 0
      %438 = vmatpush.bf16.msra.mxu0 0
      %439 = vmatpush.bf16.msra.mxu0 0
      %440 = vmatpush.bf16.msra.mxu0 0
      %441 = vmatpush.bf16.msra.mxu0 0
      %442 = vmatpush.bf16.msra.mxu0 0
      %443 = vmatpush.bf16.msra.mxu0 %v434
      %444 = vmatmul.bf16.gmra.mxu0 %v431
      %v445 = vpop.f32.mrf.mxu0
      %v446 = vadd.f32 %v280, %v445
      %v447 = vpop.f32.mrf.mxu0
      %448 = vdwg.mxu0
      %v449 = vsel %vm310, %v427, 0.0
      %450 = vadd.xlane.f32.xlu0 %v449
      %v451 = vpop.xlane.xlu0 %450
      %v452 = vsel %vm310, %v446, 0.0
      %453 = vadd.xlane.f32.xlu0 %v452
      %v454 = vpop.xlane.xlu0 %453
      %v455 = vrcp.pop 32.0
      %v456 = vmul.f32 32.0, %v455
      %v457 = vsub.f32 1.0, %v456
      %v458 = vmul.f32 %v455, %v457
      %v459 = vadd.f32 %v455, %v458
      %vm460 = vweird.f32 %v455
      %v461 = vsel %vm460, %v455, %v459
      %v462 = vmul.f32 %v451, %v461
      %v463 = vmul.f32 %v454, %v461
      %v464 = vsub.f32 %v427, %v462
      %v465 = vsub.f32 %v446, %v463
      %v466 = vmul.f32 %v464, %v464
      %v467 = vmul.f32 %v465, %v465
      %v468 = vsel %vm310, %v466, 0.0
      %469 = vadd.xlane.f32.xlu0 %v468
      %v470 = vpop.xlane.xlu0 %469
      %v471 = vsel %vm310, %v467, 0.0
      %472 = vadd.xlane.f32.xlu0 %v471
      %v473 = vpop.xlane.xlu0 %472
      %v474 = vmul.f32 %v470, %v461
      %v475 = vmul.f32 %v473, %v461
      %v476 = vadd.f32 %v474, 1e-05
      %v477 = vadd.f32 %v475, 1e-05
      %v478 = vrsqrt.pop %v476
      %v479 = vmul.f32 %v478, %v476
      %v480 = vmul.f32 %v479, %v478
      %v481 = vmul.f32 0.5, %v480
      %v482 = vsub.f32 1.5, %v481
      %v483 = vmul.f32 %v478, %v482
      %vm484 = vweird.f32 %v476
      %vm485 = vweird.f32 %v478
      %vm486 = vmor %vm484, %vm485
      %v487 = vsel %vm486, %v478, %v483
      %v488 = vrsqrt.pop %v477
      %v489 = vmul.f32 %v488, %v477
      %v490 = vmul.f32 %v489, %v488
      %v491 = vmul.f32 0.5, %v490
      %v492 = vsub.f32 1.5, %v491
      %v493 = vmul.f32 %v488, %v492
      %vm494 = vweird.f32 %v477
      %vm495 = vweird.f32 %v488
      %vm496 = vmor %vm494, %vm495
      %v497 = vsel %vm496, %v488, %v493
      %v498 = vmul.f32 %v464, %v487
      %v499 = vmul.f32 %v465, %v497
      %500 = vrot.lane.b32.xlu0 %v291, 64
      %v501 = vpop.permute.xlu0 %500
      %v503 = vmul.f32 %v498, %v501
      %v504 = vmul.f32 %v499, %v501
      %505 = vrot.lane.b32.xlu0 %v291, 32
      %v506 = vpop.permute.xlu0 %505
      %v508 = vadd.f32 %v503, %v506
      %v509 = vadd.f32 %v504, %v506
      %v510 = vpack.c.bf16 %v509, %v508
      %511 = vrot.lane.b32.xlu0 %v306, 96
      %v512 = vpop.permute.xlu0 %511
      %513 = vrot.lane.b32.xlu0 %v307, 96
      %v514 = vpop.permute.xlu0 %513
      %517 = vrot.lane.b32.xlu0 %v291, 96
      %v518 = vpop.permute.xlu0 %517
      %v521 = vsel %vm310, %v510, 0
      %523 = vmatpush.bf16.msra.mxu0 0
      %524 = vmatpush.bf16.msra.mxu0 0
      %525 = vmatpush.bf16.msra.mxu0 0
      %526 = vmatpush.bf16.msra.mxu0 0
      %527 = vmatpush.bf16.msra.mxu0 0
      %528 = vmatpush.bf16.msra.mxu0 0
      %529 = vmatpush.bf16.msra.mxu0 %v514
      %530 = vmatpush.bf16.msra.mxu0 %v512
      %531 = vmatmul.bf16.gmra.mxu0 %v521
      %v532 = vpop.f32.mrf.mxu0
      %v533 = vadd.f32 %v518, %v532
      %v534 = vpop.f32.mrf.mxu0
      %v535 = vadd.f32 %v518, %v534
      %536 = vdwg.mxu0
      %v537 = vmax.f32 %v533, 0.0
      %v538 = vmax.f32 %v535, 0.0
      %v539 = vadd.f32 %v537, %v508
      %v540 = vadd.f32 %v538, %v509
      %v541 = vsel %vm310, %v539, 0.0
      %542 = vadd.xlane.f32.xlu0 %v541
      %v543 = vpop.xlane.xlu0 %542
      %v544 = vsel %vm310, %v540, 0.0
      %545 = vadd.xlane.f32.xlu0 %v544
      %v546 = vpop.xlane.xlu0 %545
      %v547 = vmul.f32 %v543, %v461
      %v548 = vmul.f32 %v546, %v461
      %v549 = vsub.f32 %v539, %v547
      %v550 = vsub.f32 %v540, %v548
      %v551 = vmul.f32 %v549, %v549
      %v552 = vmul.f32 %v550, %v550
      %v553 = vsel %vm310, %v551, 0.0
      %554 = vadd.xlane.f32.xlu0 %v553
      %v555 = vpop.xlane.xlu0 %554
      %v556 = vsel %vm310, %v552, 0.0
      %557 = vadd.xlane.f32.xlu0 %v556
      %v558 = vpop.xlane.xlu0 %557
      %v559 = vmul.f32 %v555, %v461
      %v560 = vmul.f32 %v558, %v461
      %v561 = vadd.f32 %v559, 1e-05
      %v562 = vadd.f32 %v560, 1e-05
      %v563 = vrsqrt.pop %v561
      %v564 = vmul.f32 %v563, %v561
      %v565 = vmul.f32 %v564, %v563
      %v566 = vmul.f32 0.5, %v565
      %v567 = vsub.f32 1.5, %v566
      %v568 = vmul.f32 %v563, %v567
      %vm569 = vweird.f32 %v561
      %vm570 = vweird.f32 %v563
      %vm571 = vmor %vm569, %vm570
      %v572 = vsel %vm571, %v563, %v568
      %v573 = vrsqrt.pop %v562
      %v574 = vmul.f32 %v573, %v562
      %v575 = vmul.f32 %v574, %v573
      %v576 = vmul.f32 0.5, %v575
      %v577 = vsub.f32 1.5, %v576
      %v578 = vmul.f32 %v573, %v577
      %vm579 = vweird.f32 %v562
      %vm580 = vweird.f32 %v573
      %vm581 = vmor %vm579, %vm580
      %v582 = vsel %vm581, %v573, %v578
      %v583 = vmul.f32 %v549, %v572
      %v584 = vmul.f32 %v550, %v582
      %v585 = vrot.slane %v287, 1
      %v586 = vperm.slane %v585, 0
      %v588 = vmul.f32 %v583, %v586
      %v589 = vmul.f32 %v584, %v586
      %590 = vrot.lane.b32.xlu0 %v287, 96
      %v591 = vpop.permute.xlu0 %590
      %v592 = vrot.slane %v591, 1
      %v593 = vperm.slane %v592, 0
      %v595 = vadd.f32 %v588, %v593
      %v596 = vadd.f32 %v589, %v593
      %597 = vst.msk [vmem:[%s267] sm:$0xff] %vm310, %v595
      %598 = vst.msk [vmem:[%s267 + $0x8] sm:$0xff] %vm310, %v596
      %s599 = smul.u32 2, %s19
      %p600 = scmp.lt.s32.totalorder %s599, 1
      %s601 = scalar_select %p600, %s599, 1
      %s602 = smul.addr %s601, 8
      %s603 = scalar_lea.vmem %s4, %s602
      // Predicated region
      $region41: #{encoder_decoder_forward.2} parent=35 // pred_check
        %p604 = pneg %p149
      $region42: #{encoder_decoder_forward.2} parent=35 // pred_check_branch
        %606 = sbr.rel (%p604) target = $region44
      $region43: #{encoder_decoder_forward.2} parent=35 // pred_region
        %s607 = smul.u32 2, %s19
      $region44: #{encoder_decoder_forward.2} parent=35 // pred_fallthru
        _
      // Predicated region
      $region45: #{encoder_decoder_forward.2} parent=35 // pred_check
        %p608 = pneg %p149
      $region46: #{encoder_decoder_forward.2} parent=35 // pred_check_branch
        %610 = sbr.rel (%p608) target = $region48
      $region47: #{encoder_decoder_forward.2} parent=35 // pred_region
        %s611 = smul.u32 2, %s19
        %p612 = scmp.lt.s32.totalorder %s611, 1
        %s613 = scalar_select %p612, %s611, 1
        %s614 = smul.addr %s613, 8
        %s615 = scalar_lea.vmem %s4, %s614
      $region48: #{encoder_decoder_forward.2} parent=35 // pred_fallthru
        _
    $region36: #{encoder_decoder_forward.2} parent=5 // pred_fallthru
      _
    %p616 = scmp.le.s32.totalorder 2, %s10
    // Predicated region
    $region49: #{encoder_decoder_forward.2} parent=5 // pred_check
      %p617 = pneg %p616
    $region50: #{encoder_decoder_forward.2} parent=5 // pred_check_branch
      %619 = sbr.rel (%p617) target = $region52
    $region51: #{encoder_decoder_forward.2} parent=5 // pred_region
      %s620 = ssub.s32 %s10, 2
    $region52: #{encoder_decoder_forward.2} parent=5 // pred_fallthru
      _
  $region6: #{encoder_decoder_forward.2} parent=0 // loop_footer
    %s14 = sadd.s32 1, %s10
  $region7: #{encoder_decoder_forward.2} parent=0 // loop_footer_branch
    %9 = sbr.rel target = $region3
  $region8: #{encoder_decoder_forward.2} parent=0 // loop_exit
    _

// kernel: encoder_decoder_forward.3
$region0: #{encoder_decoder_forward.3}
  #allocation0 [shape = 'u32[]', space=smem, size = 0x4, offset = 0x4, fixed_abs, tag = 'smem constant byte address 0x4 - core index']
  #allocation1 [shape = 'u32[72,128]{1,0:T(1,128)}', space=vmem, size = 0x9000, scoped, tag = 'internal scratch']
  %s0 = inlined_call_operand.vmem [shape: f32[2,8,32], index: 0, kind: input, shape index: {}]
  %s1 = inlined_call_operand.vmem [shape: bf16[2,8,32], index: 1, kind: input, shape index: {}]
  %s2 = inlined_call_operand.vmem [shape: f32[2,1,8], index: 2, kind: input, shape index: {}]
  %s3 = inlined_call_operand.vmem [shape: f32[2,1,8], index: 3, kind: input, shape index: {}]
  %s4 = inlined_call_operand.vmem [shape: bf16[2,32,96], index: 4, kind: input, shape index: {}]
  %s5 = inlined_call_operand.vmem [shape: f32[2,1,288], index: 5, kind: input, shape index: {}]
  %s6 = inlined_call_operand.hbm [shape: f32[2,8,32], index: 6, kind: output, shape index: {}]
  %s7 = sld [smem:[#allocation0]]
  $region61: #{encoder_decoder_forward.3} parent=0
    _
  %s9 = ssub.s32 1, %s7
  %s10 = scalar_select 0, %s9, %s7
  $region1: #{encoder_decoder_forward.3} parent=0
    #allocation2 [shape = 'u8[8192]{0}', space=vmem, size = 0x2000, scoped, tag = 'output window, operand 0, single buffered']
    #allocation3 [shape = 's32[2]{0}', space=sflag, size = 0x8, scoped, tag = 'scoped memory for encoder_decoder_forward.3']
    %11 = vsyncpa [#allocation3], 0
    loop: start=0, step=1, limit=4
    $region2: #{encoder_decoder_forward.3} parent=1 // loop_pre_header
      _
    $region3: #{encoder_decoder_forward.3} parent=1 // loop_header
      %s13 = sphi 0, %s17
      %p14 = scmp.ge.s32.totalorder %s13, 4
      %s20 = sphi 0, %s32
      %s21 = sphi 0, %s28
      %s22 = sphi 0, %s20
      %s23 = sphi 0, %s21
      %s24 = sphi 0, %s22
      %s25 = sphi 0, %s23
      %s35 = sphi 0, %s37
      %s38 = sphi 0, %s35
      %s39 = sphi 0, %s38
      %s55 = sphi 0, %s39
      %s61 = sphi 0, %s63
      %s64 = sphi 0, %s61
      %s65 = sphi 0, %s64
      %s81 = sphi 0, %s65
      %s87 = sphi 0, %s89
      %s90 = sphi 0, %s87
      %s91 = sphi 0, %s90
      %s107 = sphi 0, %s91
      %s113 = sphi 0, %s115
      %s116 = sphi 0, %s113
      %s117 = sphi 0, %s116
      %s133 = sphi 0, %s117
      %s139 = sphi 0, %s141
      %s142 = sphi 0, %s139
      %s143 = sphi 0, %s142
      %s159 = sphi 0, %s143
      %s165 = sphi 0, %s167
      %s168 = sphi 0, %s165
      %s169 = sphi 0, %s168
      %s185 = sphi 0, %s169
      %s191 = sphi 0, %s193
      %s194 = sphi 0, %s191
      %s195 = sphi 0, %s194
      %s211 = sphi 0, %s195
    $region4: #{encoder_decoder_forward.3} parent=1 // loop_header_branch
      %16 = sbr.rel (%p14) target = $region8
    $region5: #{encoder_decoder_forward.3} parent=1 // loop_body
      %s18 = ssub.s32 %s13, 1
      %s19 = ssub.s32 %s13, 2
      %s26 = sadd.s32 1, %s21
      %p27 = scmp.ge.s32.totalorder %s26, 2
      %s28 = scalar_select %p27, 0, %s26
      %s29 = sadd.s32 1, %s20
      %s30 = scalar_select %p27, %s29, %s20
      %p31 = scmp.ge.s32.totalorder %s30, 1
      %s32 = scalar_select %p31, 0, %s30
      %s33 = ssub.s32 %s20, %s32
      %p34 = scmp.eq.s32.totalorder %s33, 0
      %s36 = sadd.s32 %s35, 1
      %s37 = scalar_select %p34, %s35, %s36
      %p40 = pneg %p34
      %p41 = scmp.eq.s32.totalorder %s13, 1
      %p42 = por %p40, %p41
      %p43 = scmp.ne.s32.totalorder %s35, %s38
      %p44 = scmp.eq.s32.totalorder %s13, 0
      %p45 = por %p43, %p44
      %p46 = scmp.ne.s32.totalorder %s35, %s38
      %p47 = scmp.eq.s32.totalorder %s18, 1
      %p48 = por %p46, %p47
      %p49 = scmp.ne.s32.totalorder %s38, %s39
      %p50 = scmp.eq.s32.totalorder %s18, 0
      %p51 = por %p49, %p50
      %p52 = scmp.ne.s32.totalorder %s38, %s39
      %p53 = scmp.eq.s32.totalorder %s19, 1
      %p54 = por %p52, %p53
      %p56 = scmp.ne.s32.totalorder %s39, %s55
      %p57 = scmp.eq.s32.totalorder %s19, 0
      %p58 = por %p56, %p57
      %s59 = ssub.s32 %s20, %s32
      %p60 = scmp.eq.s32.totalorder %s59, 0
      %s62 = sadd.s32 %s61, 1
      %s63 = scalar_select %p60, %s61, %s62
      %p66 = pneg %p60
      %p67 = scmp.eq.s32.totalorder %s13, 1
      %p68 = por %p66, %p67
      %p69 = scmp.ne.s32.totalorder %s61, %s64
      %p70 = scmp.eq.s32.totalorder %s13, 0
      %p71 = por %p69, %p70
      %p72 = scmp.ne.s32.totalorder %s61, %s64
      %p73 = scmp.eq.s32.totalorder %s18, 1
      %p74 = por %p72, %p73
      %p75 = scmp.ne.s32.totalorder %s64, %s65
      %p76 = scmp.eq.s32.totalorder %s18, 0
      %p77 = por %p75, %p76
      %p78 = scmp.ne.s32.totalorder %s64, %s65
      %p79 = scmp.eq.s32.totalorder %s19, 1
      %p80 = por %p78, %p79
      %p82 = scmp.ne.s32.totalorder %s65, %s81
      %p83 = scmp.eq.s32.totalorder %s19, 0
      %p84 = por %p82, %p83
      %s85 = ssub.s32 %s20, %s32
      %p86 = scmp.eq.s32.totalorder %s85, 0
      %s88 = sadd.s32 %s87, 1
      %s89 = scalar_select %p86, %s87, %s88
      %p92 = pneg %p86
      %p93 = scmp.eq.s32.totalorder %s13, 1
      %p94 = por %p92, %p93
      %p95 = scmp.ne.s32.totalorder %s87, %s90
      %p96 = scmp.eq.s32.totalorder %s13, 0
      %p97 = por %p95, %p96
      %p98 = scmp.ne.s32.totalorder %s87, %s90
      %p99 = scmp.eq.s32.totalorder %s18, 1
      %p100 = por %p98, %p99
      %p101 = scmp.ne.s32.totalorder %s90, %s91
      %p102 = scmp.eq.s32.totalorder %s18, 0
      %p103 = por %p101, %p102
      %p104 = scmp.ne.s32.totalorder %s90, %s91
      %p105 = scmp.eq.s32.totalorder %s19, 1
      %p106 = por %p104, %p105
      %p108 = scmp.ne.s32.totalorder %s91, %s107
      %p109 = scmp.eq.s32.totalorder %s19, 0
      %p110 = por %p108, %p109
      %s111 = ssub.s32 %s20, %s32
      %p112 = scmp.eq.s32.totalorder %s111, 0
      %s114 = sadd.s32 %s113, 1
      %s115 = scalar_select %p112, %s113, %s114
      %p118 = pneg %p112
      %p119 = scmp.eq.s32.totalorder %s13, 1
      %p120 = por %p118, %p119
      %p121 = scmp.ne.s32.totalorder %s113, %s116
      %p122 = scmp.eq.s32.totalorder %s13, 0
      %p123 = por %p121, %p122
      %p124 = scmp.ne.s32.totalorder %s113, %s116
      %p125 = scmp.eq.s32.totalorder %s18, 1
      %p126 = por %p124, %p125
      %p127 = scmp.ne.s32.totalorder %s116, %s117
      %p128 = scmp.eq.s32.totalorder %s18, 0
      %p129 = por %p127, %p128
      %p130 = scmp.ne.s32.totalorder %s116, %s117
      %p131 = scmp.eq.s32.totalorder %s19, 1
      %p132 = por %p130, %p131
      %p134 = scmp.ne.s32.totalorder %s117, %s133
      %p135 = scmp.eq.s32.totalorder %s19, 0
      %p136 = por %p134, %p135
      %s137 = ssub.s32 %s21, %s28
      %p138 = scmp.eq.s32.totalorder %s137, 0
      %s140 = sadd.s32 %s139, 1
      %s141 = scalar_select %p138, %s139, %s140
      %p144 = pneg %p138
      %p145 = scmp.eq.s32.totalorder %s13, 1
      %p146 = por %p144, %p145
      %p147 = scmp.ne.s32.totalorder %s139, %s142
      %p148 = scmp.eq.s32.totalorder %s13, 0
      %p149 = por %p147, %p148
      %p150 = scmp.ne.s32.totalorder %s139, %s142
      %p151 = scmp.eq.s32.totalorder %s18, 1
      %p152 = por %p150, %p151
      %p153 = scmp.ne.s32.totalorder %s142, %s143
      %p154 = scmp.eq.s32.totalorder %s18, 0
      %p155 = por %p153, %p154
      %p156 = scmp.ne.s32.totalorder %s142, %s143
      %p157 = scmp.eq.s32.totalorder %s19, 1
      %p158 = por %p156, %p157
      %p160 = scmp.ne.s32.totalorder %s143, %s159
      %p161 = scmp.eq.s32.totalorder %s19, 0
      %p162 = por %p160, %p161
      %s163 = ssub.s32 %s21, %s28
      %p164 = scmp.eq.s32.totalorder %s163, 0
      %s166 = sadd.s32 %s165, 1
      %s167 = scalar_select %p164, %s165, %s166
      %p170 = pneg %p164
      %p171 = scmp.eq.s32.totalorder %s13, 1
      %p172 = por %p170, %p171
      %p173 = scmp.ne.s32.totalorder %s165, %s168
      %p174 = scmp.eq.s32.totalorder %s13, 0
      %p175 = por %p173, %p174
      %p176 = scmp.ne.s32.totalorder %s165, %s168
      %p177 = scmp.eq.s32.totalorder %s18, 1
      %p178 = por %p176, %p177
      %p179 = scmp.ne.s32.totalorder %s168, %s169
      %p180 = scmp.eq.s32.totalorder %s18, 0
      %p181 = por %p179, %p180
      %p182 = scmp.ne.s32.totalorder %s168, %s169
      %p183 = scmp.eq.s32.totalorder %s19, 1
      %p184 = por %p182, %p183
      %p186 = scmp.ne.s32.totalorder %s169, %s185
      %p187 = scmp.eq.s32.totalorder %s19, 0
      %p188 = por %p186, %p187
      %s189 = ssub.s32 %s20, %s32
      %p190 = scmp.eq.s32.totalorder %s189, 0
      %s192 = sadd.s32 %s191, 1
      %s193 = scalar_select %p190, %s191, %s192
      %p196 = pneg %p190
      %p197 = scmp.eq.s32.totalorder %s13, 1
      %p198 = por %p196, %p197
      %p199 = scmp.ne.s32.totalorder %s191, %s194
      %p200 = scmp.eq.s32.totalorder %s13, 0
      %p201 = por %p199, %p200
      %p202 = scmp.ne.s32.totalorder %s191, %s194
      %p203 = scmp.eq.s32.totalorder %s18, 1
      %p204 = por %p202, %p203
      %p205 = scmp.ne.s32.totalorder %s194, %s195
      %p206 = scmp.eq.s32.totalorder %s18, 0
      %p207 = por %p205, %p206
      %p208 = scmp.ne.s32.totalorder %s194, %s195
      %p209 = scmp.eq.s32.totalorder %s19, 1
      %p210 = por %p208, %p209
      %p212 = scmp.ne.s32.totalorder %s195, %s211
      %p213 = scmp.eq.s32.totalorder %s19, 0
      %p214 = por %p212, %p213
      %p215 = scmp.le.s32.totalorder 1, %s13
      %p216 = scmp.lt.s32.totalorder %s13, 3
      %p217 = pnand %p215, %p216
      %p218 = pneg %p217
      // Predicated region
      $region9: #{encoder_decoder_forward.3} parent=5 // pred_check
        _
      $region10: #{encoder_decoder_forward.3} parent=5 // pred_check_branch
        %220 = sbr.rel (%p217) target = $region12
      $region11: #{encoder_decoder_forward.3} parent=5 // pred_region
        %s221 = ssub.s32 %s13, 1
        // Predicated region
        $region13: #{encoder_decoder_forward.3} parent=11 // pred_check
          %p222 = pneg %p51
        $region14: #{encoder_decoder_forward.3} parent=11 // pred_check_branch
          %224 = sbr.rel (%p222) target = $region16
        $region15: #{encoder_decoder_forward.3} parent=11 // pred_region
          %s225 = smul.u32 2, %s22
          %p226 = scmp.lt.s32.totalorder %s225, 1
          %s227 = scalar_select %p226, %s225, 1
          %s228 = smul.addr %s227, 8
          %s229 = scalar_lea.vmem %s0, %s228
          %s230 = smul.u32 2, %s22
        $region16: #{encoder_decoder_forward.3} parent=11 // pred_fallthru
          _
        // Predicated region
        $region17: #{encoder_decoder_forward.3} parent=11 // pred_check
          %p231 = pneg %p77
        $region18: #{encoder_decoder_forward.3} parent=11 // pred_check_branch
          %233 = sbr.rel (%p231) target = $region20
        $region19: #{encoder_decoder_forward.3} parent=11 // pred_region
          %s234 = smul.u32 2, %s22
          %p235 = scmp.lt.s32.totalorder %s234, 1
          %s236 = scalar_select %p235, %s234, 1
          %s237 = smul.addr %s236, 4
          %s238 = scalar_lea.vmem %s1, %s237
          %s239 = smul.u32 2, %s22
        $region20: #{encoder_decoder_forward.3} parent=11 // pred_fallthru
          _
        // Predicated region
        $region21: #{encoder_decoder_forward.3} parent=11 // pred_check
          %p240 = pneg %p103
        $region22: #{encoder_decoder_forward.3} parent=11 // pred_check_branch
          %242 = sbr.rel (%p240) target = $region24
        $region23: #{encoder_decoder_forward.3} parent=11 // pred_region
          %s243 = smul.u32 2, %s22
          %p244 = scmp.lt.s32.totalorder %s243, 1
          %s245 = scalar_select %p244, %s243, 1
          %s246 = scalar_lea.vmem %s2, %s245
          %s247 = smul.u32 2, %s22
        $region24: #{encoder_decoder_forward.3} parent=11 // pred_fallthru
          _
        // Predicated region
        $region25: #{encoder_decoder_forward.3} parent=11 // pred_check
          %p248 = pneg %p129
        $region26: #{encoder_decoder_forward.3} parent=11 // pred_check_branch
          %250 = sbr.rel (%p248) target = $region28
        $region27: #{encoder_decoder_forward.3} parent=11 // pred_region
          %s251 = smul.u32 2, %s22
          %p252 = scmp.lt.s32.totalorder %s251, 1
          %s253 = scalar_select %p252, %s251, 1
          %s254 = scalar_lea.vmem %s3, %s253
          %s255 = smul.u32 2, %s22
        $region28: #{encoder_decoder_forward.3} parent=11 // pred_fallthru
          _
      $region12: #{encoder_decoder_forward.3} parent=5 // pred_fallthru
        _
      %p256 = scmp.lt.s32.totalorder %s13, 2
      // Predicated region
      $region29: #{encoder_decoder_forward.3} parent=5 // pred_check
        %p257 = pneg %p256
      $region30: #{encoder_decoder_forward.3} parent=5 // pred_check_branch
        %259 = sbr.rel (%p257) target = $region32
      $region31: #{encoder_decoder_forward.3} parent=5 // pred_region
        // Predicated region
        $region33: #{encoder_decoder_forward.3} parent=31 // pred_check
          %p260 = pneg %p149
        $region34: #{encoder_decoder_forward.3} parent=31 // pred_check_branch
          %262 = sbr.rel (%p260) target = $region36
        $region35: #{encoder_decoder_forward.3} parent=31 // pred_region
          %p263 = scmp.lt.s32.totalorder %s21, 1
          %s264 = scalar_select %p263, %s21, 1
          %s265 = smul.addr %s264, 4
          %s266 = smul.addr %s265, 4
          %s267 = scalar_lea.vmem %s4, %s266
        $region36: #{encoder_decoder_forward.3} parent=31 // pred_fallthru
          _
        // Predicated region
        $region37: #{encoder_decoder_forward.3} parent=31 // pred_check
          %p268 = pneg %p175
        $region38: #{encoder_decoder_forward.3} parent=31 // pred_check_branch
          %270 = sbr.rel (%p268) target = $region40
        $region39: #{encoder_decoder_forward.3} parent=31 // pred_region
          %p271 = scmp.lt.s32.totalorder %s21, 1
          %s272 = scalar_select %p271, %s21, 1
          %s273 = smul.addr %s272, 3
          %s274 = scalar_lea.vmem %s5, %s273
        $region40: #{encoder_decoder_forward.3} parent=31 // pred_fallthru
          _
      $region32: #{encoder_decoder_forward.3} parent=5 // pred_fallthru
        _
      %p275 = scmp.le.s32.totalorder 1, %s13
      %p276 = scmp.lt.s32.totalorder %s13, 3
      %p277 = pnand %p275, %p276
      %p278 = pneg %p277
      // Predicated region
      $region41: #{encoder_decoder_forward.3} parent=5 // pred_check
        _
      $region42: #{encoder_decoder_forward.3} parent=5 // pred_check_branch
        %280 = sbr.rel (%p277) target = $region44
      $region43: #{encoder_decoder_forward.3} parent=5 // pred_region
        %s281 = ssub.s32 %s13, 1
        %s282 = smul.u32 2, %s22
        %p283 = scmp.lt.s32.totalorder %s282, 1
        %s284 = scalar_select %p283, %s282, 1
        %s285 = smul.addr %s284, 8
        %s286 = scalar_lea.vmem %s0, %s285
        %p287 = pneg %p51
        %p288 = pneg %p48
        %s289 = smul.u32 2, %s22
        %p290 = scmp.lt.s32.totalorder %s289, 1
        %s291 = scalar_select %p290, %s289, 1
        %s292 = smul.addr %s291, 4
        %s293 = scalar_lea.vmem %s1, %s292
        %p294 = pneg %p77
        %p295 = pneg %p74
        %s296 = smul.u32 2, %s22
        %p297 = scmp.lt.s32.totalorder %s296, 1
        %s298 = scalar_select %p297, %s296, 1
        %s299 = scalar_lea.vmem %s2, %s298
        %p300 = pneg %p103
        %p301 = pneg %p100
        %s302 = smul.u32 2, %s22
        %p303 = scmp.lt.s32.totalorder %s302, 1
        %s304 = scalar_select %p303, %s302, 1
        %s305 = scalar_lea.vmem %s3, %s304
        %p306 = pneg %p129
        %p307 = pneg %p126
        %p308 = scmp.lt.s32.totalorder %s23, 1
        %s309 = scalar_select %p308, %s23, 1
        %s310 = smul.addr %s309, 4
        %s311 = smul.addr %s310, 4
        %s312 = scalar_lea.vmem %s4, %s311
        %p313 = pneg %p155
        %p314 = pneg %p152
        %p315 = scmp.lt.s32.totalorder %s23, 1
        %s316 = scalar_select %p315, %s23, 1
        %s317 = smul.addr %s316, 3
        %s318 = scalar_lea.vmem %s5, %s317
        %p319 = pneg %p181
        %p320 = pneg %p178
        %p321 = pneg %p207
        %p322 = pneg %p204
        %s323 = smul.u32 2, %s22
        %p324 = scmp.lt.s32.totalorder %s323, 1
        %s325 = scalar_select %p324, %s323, 1
        %s326 = smul.addr %s325, 8
        %s327 = scalar_lea.vmem %s0, %s326
        %s328 = smul.u32 2, %s22
        %s329 = smul.u32 2, %s22
        %p330 = scmp.lt.s32.totalorder %s329, 1
        %s331 = scalar_select %p330, %s329, 1
        %s332 = smul.addr %s331, 4
        %s333 = scalar_lea.vmem %s1, %s332
        %s334 = smul.u32 2, %s22
        %s335 = smul.u32 2, %s22
        %p336 = scmp.lt.s32.totalorder %s335, 1
        %s337 = scalar_select %p336, %s335, 1
        %s338 = scalar_lea.vmem %s2, %s337
        %s339 = smul.u32 2, %s22
        %s340 = smul.u32 2, %s22
        %p341 = scmp.lt.s32.totalorder %s340, 1
        %s342 = scalar_select %p341, %s340, 1
        %s343 = scalar_lea.vmem %s3, %s342
        %s344 = smul.u32 2, %s22
        %p345 = scmp.lt.s32.totalorder %s23, 1
        %s346 = scalar_select %p345, %s23, 1
        %s347 = smul.addr %s346, 4
        %s348 = smul.addr %s347, 4
        %s349 = scalar_lea.vmem %s4, %s348
        %p350 = scmp.lt.s32.totalorder %s23, 1
        %s351 = scalar_select %p350, %s23, 1
        %s352 = smul.addr %s351, 3
        %s353 = scalar_lea.vmem %s5, %s352
        %s354 = smul.u32 2, %s22
        %p356 = scmp.eq.s32.totalorder %s23, 0
        // Predicated region
        $region45: #{encoder_decoder_forward.3} parent=43 // pred_check
          %p357 = pneg %p356
        $region46: #{encoder_decoder_forward.3} parent=43 // pred_check_branch
          %359 = sbr.rel (%p357) target = $region48
        $region47: #{encoder_decoder_forward.3} parent=43 // pred_region
          %v360 = vld [vmem:[%s327] sm:$0xff]
          %v361 = vld [vmem:[%s327 + $0x8] sm:$0xff]
          %vm362 = vcmask 261120
          %363 = vst.msk [vmem:[#allocation2] sm:$0xff] %vm362, %v360
          %364 = vst.msk [vmem:[#allocation2 + $0x8] sm:$0xff] %vm362, %v361
        $region48: #{encoder_decoder_forward.3} parent=43 // pred_fallthru
          _
        %v365 = vld [vmem:[#allocation2] sm:$0xff]
        %v366 = vld [vmem:[#allocation2 + $0x8] sm:$0xff]
        %v367 = vld [vmem:[%s333] sm:$0xf]
        %v368 = vld [vmem:[%s333 + $0x4] sm:$0xf]
        %v369 = vld [vmem:[%s343] sm:$0x1]
        %v370 = vld [vmem:[%s343 + $0x1] sm:$0x1]
        %v371 = vld [vmem:[%s349] sm:$0xf]
        %v372 = vld [vmem:[%s349 + $0x4] sm:$0xf]
        %v373 = vld [vmem:[%s349 + $0x8] sm:$0xf]
        %v374 = vld [vmem:[%s349 + $0xc] sm:$0xf]
        %v375 = vld [vmem:[%s353] sm:$0x7]
        %v376 = vlaneseq
        %v377 = vshrl.u32 %v376, 7
        %v378 = vlaneseq
        %v379 = vand.u32 %v378, 127
        %vm380 = vcmp.gt.s32.totalorder %v379, %v377
        %v381 = vsel %vm380, -1e+09, 0.0
        %v382 = vld [vmem:[%s338] sm:$0x1]
        %v383 = vld [vmem:[%s338 + $0x1] sm:$0x1]
        %v386 = vperm.slane %v382, 0
        %v387 = vperm.slane %v383, 0
        %v390 = vadd.f32 %v386, %v381
        %v391 = vadd.f32 %v387, %v381
        %v392 = vpack.c.bf16 %v365, %v365
        %v393 = vpack.c.bf16 %v366, %v366
        %v395 = vperm.slane %v375, 0
        %v399 = vunpack.c.l.b16 %v392
        %v400 = vunpack.c.l.b16 %v393
        %v401 = vpack.c.b16 %v400, %v399
        %v406 = vunpack.c.l.b16 %v371
        %v407 = vunpack.c.l.b16 %v372
        %v408 = vunpack.c.l.b16 %v373
        %v409 = vunpack.c.l.b16 %v374
        %v410 = vpack.c.b16 %v407, %v406
        %v411 = vpack.c.b16 %v409, %v408
        %vm414 = vcmask 261120
        %v416 = vsel %vm414, %v401, 0
        %418 = vmatpush.bf16.msra.mxu0 0
        %419 = vmatpush.bf16.msra.mxu0 0
        %420 = vmatpush.bf16.msra.mxu0 0
        %421 = vmatpush.bf16.msra.mxu0 0
        %422 = vmatpush.bf16.msra.mxu0 0
        %423 = vmatpush.bf16.msra.mxu0 0
        %424 = vmatpush.bf16.msra.mxu0 %v411
        %425 = vmatpush.bf16.msra.mxu0 %v410
        %426 = vmatmul.bf16.gmra.mxu0 %v416
        %v427 = vpop.f32.mrf.mxu0
        %v428 = vadd.f32 %v395, %v427
        %v429 = vpop.f32.mrf.mxu0
        %v430 = vadd.f32 %v395, %v429
        %431 = vdwg.mxu0
        %v432 = vpack.c.bf16 %v428, %v428
        %v433 = vpack.c.bf16 %v430, %v430
        %v435 = vunpack.c.l.b16 %v432
        %v436 = vpack.c.b16 %v435, %v435
        %437 = vrot.lane.b32.xlu0 %v436, 112
        %v438 = vpop.permute.xlu0 %437
        %vm439 = vcmask 130048
        %v441 = vsel %vm439, %v432, 0
        %v444 = vsel %vm439, %v438, 0
        %446 = vmatpush.bf16.xpose.msra.mxu0 0
        %447 = vmatpush.bf16.xpose.msra.mxu0 0
        %448 = vmatpush.bf16.xpose.msra.mxu0 0
        %449 = vmatpush.bf16.xpose.msra.mxu0 0
        %450 = vmatpush.bf16.xpose.msra.mxu0 0
        %451 = vmatpush.bf16.xpose.msra.mxu0 0
        %452 = vmatpush.bf16.xpose.msra.mxu0 0
        %453 = vmatpush.bf16.xpose.msra.mxu0 %v444
        %454 = vmatmul.bf16.gmra.mxu0 %v441
        %v455 = vpop.f32.mrf.mxu0
        %v456 = vadd.f32 %v390, %v455
        %v457 = vpop.f32.mrf.mxu0
        %458 = vdwg.mxu0
        %v460 = vunpack.c.l.b16 %v433
        %v461 = vpack.c.b16 %v460, %v460
        %462 = vrot.lane.b32.xlu0 %v461, 112
        %v463 = vpop.permute.xlu0 %462
        %v465 = vsel %vm439, %v433, 0
        %v468 = vsel %vm439, %v463, 0
        %470 = vmatpush.bf16.xpose.msra.mxu0 0
        %471 = vmatpush.bf16.xpose.msra.mxu0 0
        %472 = vmatpush.bf16.xpose.msra.mxu0 0
        %473 = vmatpush.bf16.xpose.msra.mxu0 0
        %474 = vmatpush.bf16.xpose.msra.mxu0 0
        %475 = vmatpush.bf16.xpose.msra.mxu0 0
        %476 = vmatpush.bf16.xpose.msra.mxu0 0
        %477 = vmatpush.bf16.xpose.msra.mxu0 %v468
        %478 = vmatmul.bf16.gmra.mxu0 %v465
        %v479 = vpop.f32.mrf.mxu0
        %v480 = vadd.f32 %v391, %v479
        %v481 = vpop.f32.mrf.mxu0
        %482 = vdwg.mxu0
        %vm483 = vcmask 64512
        %v484 = vsel %vm483, %v456, -inf
        %485 = vmax.xlane.f32.xlu0 %v484
        %v486 = vpop.xlane.xlu0 %485
        %v487 = vsel %vm483, %v480, -inf
        %488 = vmax.xlane.f32.xlu0 %v487
        %v489 = vpop.xlane.xlu0 %488
        %v490 = vsub.f32 %v456, %v486
        %v491 = vsub.f32 %v480, %v489
        %v492 = vmul.f32 %v490, 1.442695
        %v493 = vpow.pop %v492
        %v494 = vmul.f32 %v491, 1.442695
        %v495 = vpow.pop %v494
        %v496 = vsel %vm483, %v493, 0.0
        %497 = vadd.xlane.f32.xlu0 %v496
        %v498 = vpop.xlane.xlu0 %497
        %v499 = vsel %vm483, %v495, 0.0
        %500 = vadd.xlane.f32.xlu0 %v499
        %v501 = vpop.xlane.xlu0 %500
        %v502 = vrcp.pop %v498
        %v503 = vrcp.pop %v501
        %v504 = vmul.f32 %v493, %v502
        %v505 = vmul.f32 %v495, %v503
        %v506 = vpack.c.bf16 %v504, %v504
        %v507 = vpack.c.bf16 %v505, %v505
        %v509 = vsel %vm483, %v506, 0
        %vm511 = vcmask 1043456
        %v513 = vsel %vm511, %v392, 0
        %515 = vmatpush.bf16.msra.mxu0 0
        %516 = vmatpush.bf16.msra.mxu0 0
        %517 = vmatpush.bf16.msra.mxu0 0
        %518 = vmatpush.bf16.msra.mxu0 0
        %519 = vmatpush.bf16.msra.mxu0 0
        %520 = vmatpush.bf16.msra.mxu0 0
        %521 = vmatpush.bf16.msra.mxu0 0
        %522 = vmatpush.bf16.msra.mxu0 %v513
        %523 = vmatmul.bf16.gmra.mxu0 %v509
        %v524 = vpop.f32.mrf.mxu0
        %v525 = vadd.f32 %v365, %v524
        %v526 = vpop.f32.mrf.mxu0
        %527 = vdwg.mxu0
        %v529 = vsel %vm483, %v507, 0
        %v532 = vsel %vm511, %v393, 0
        %534 = vmatpush.bf16.msra.mxu0 0
        %535 = vmatpush.bf16.msra.mxu0 0
        %536 = vmatpush.bf16.msra.mxu0 0
        %537 = vmatpush.bf16.msra.mxu0 0
        %538 = vmatpush.bf16.msra.mxu0 0
        %539 = vmatpush.bf16.msra.mxu0 0
        %540 = vmatpush.bf16.msra.mxu0 0
        %541 = vmatpush.bf16.msra.mxu0 %v532
        %542 = vmatmul.bf16.gmra.mxu0 %v529
        %v543 = vpop.f32.mrf.mxu0
        %v544 = vadd.f32 %v366, %v543
        %v545 = vpop.f32.mrf.mxu0
        %546 = vdwg.mxu0
        %v547 = vsel %vm414, %v525, 0.0
        %548 = vadd.xlane.f32.xlu0 %v547
        %v549 = vpop.xlane.xlu0 %548
        %v550 = vsel %vm414, %v544, 0.0
        %551 = vadd.xlane.f32.xlu0 %v550
        %v552 = vpop.xlane.xlu0 %551
        %v553 = vrcp.pop 32.0
        %v554 = vmul.f32 32.0, %v553
        %v555 = vsub.f32 1.0, %v554
        %v556 = vmul.f32 %v553, %v555
        %v557 = vadd.f32 %v553, %v556
        %vm558 = vweird.f32 %v553
        %v559 = vsel %vm558, %v553, %v557
        %v560 = vmul.f32 %v549, %v559
        %v561 = vmul.f32 %v552, %v559
        %v562 = vsub.f32 %v525, %v560
        %v563 = vsub.f32 %v544, %v561
        %v564 = vmul.f32 %v562, %v562
        %v565 = vmul.f32 %v563, %v563
        %v566 = vsel %vm414, %v564, 0.0
        %567 = vadd.xlane.f32.xlu0 %v566
        %v568 = vpop.xlane.xlu0 %567
        %v569 = vsel %vm414, %v565, 0.0
        %570 = vadd.xlane.f32.xlu0 %v569
        %v571 = vpop.xlane.xlu0 %570
        %v572 = vmul.f32 %v568, %v559
        %v573 = vmul.f32 %v571, %v559
        %v574 = vadd.f32 %v572, 1e-05
        %v575 = vadd.f32 %v573, 1e-05
        %v576 = vrsqrt.pop %v574
        %v577 = vmul.f32 %v576, %v574
        %v578 = vmul.f32 %v577, %v576
        %v579 = vmul.f32 0.5, %v578
        %v580 = vsub.f32 1.5, %v579
        %v581 = vmul.f32 %v576, %v580
        %vm582 = vweird.f32 %v574
        %vm583 = vweird.f32 %v576
        %vm584 = vmor %vm582, %vm583
        %v585 = vsel %vm584, %v576, %v581
        %v586 = vrsqrt.pop %v575
        %v587 = vmul.f32 %v586, %v575
        %v588 = vmul.f32 %v587, %v586
        %v589 = vmul.f32 0.5, %v588
        %v590 = vsub.f32 1.5, %v589
        %v591 = vmul.f32 %v586, %v590
        %vm592 = vweird.f32 %v575
        %vm593 = vweird.f32 %v586
        %vm594 = vmor %vm592, %vm593
        %v595 = vsel %vm594, %v586, %v591
        %v596 = vmul.f32 %v562, %v585
        %v597 = vmul.f32 %v563, %v595
        %598 = vrot.lane.b32.xlu0 %v395, 32
        %v599 = vpop.permute.xlu0 %598
        %v601 = vmul.f32 %v596, %v599
        %v602 = vmul.f32 %v597, %v599
        %v603 = vrot.slane %v375, 1
        %v604 = vperm.slane %v603, 0
        %v606 = vadd.f32 %v601, %v604
        %v607 = vadd.f32 %v602, %v604
        %v608 = vpack.c.bf16 %v606, %v606
        %v609 = vpack.c.bf16 %v607, %v607
        %v612 = vunpack.c.l.b16 %v608
        %v613 = vunpack.c.l.b16 %v609
        %v614 = vpack.c.b16 %v613, %v612
        %615 = vrot.lane.b32.xlu0 %v410, 96
        %v616 = vpop.permute.xlu0 %615
        %617 = vrot.lane.b32.xlu0 %v411, 96
        %v618 = vpop.permute.xlu0 %617
        %621 = vrot.lane.b32.xlu0 %v395, 96
        %v622 = vpop.permute.xlu0 %621
        %v625 = vsel %vm414, %v614, 0
        %627 = vmatpush.bf16.msra.mxu0 0
        %628 = vmatpush.bf16.msra.mxu0 0
        %629 = vmatpush.bf16.msra.mxu0 0
        %630 = vmatpush.bf16.msra.mxu0 0
        %631 = vmatpush.bf16.msra.mxu0 0
        %632 = vmatpush.bf16.msra.mxu0 0
        %633 = vmatpush.bf16.msra.mxu0 %v618
        %634 = vmatpush.bf16.msra.mxu0 %v616
        %635 = vmatmul.bf16.gmra.mxu0 %v625
        %v636 = vpop.f32.mrf.mxu0
        %v637 = vadd.f32 %v622, %v636
        %v638 = vpop.f32.mrf.mxu0
        %v639 = vadd.f32 %v622, %v638
        %640 = vdwg.mxu0
        %v643 = vunpack.c.l.b16 %v367
        %v644 = vunpack.c.l.b16 %v368
        %v645 = vpack.c.b16 %v644, %v643
        %646 = vrot.lane.b32.xlu0 %v410, 80
        %v647 = vpop.permute.xlu0 %646
        %648 = vrot.lane.b32.xlu0 %v411, 80
        %v649 = vpop.permute.xlu0 %648
        %652 = vrot.lane.b32.xlu0 %v395, 80
        %v653 = vpop.permute.xlu0 %652
        %v656 = vsel %vm414, %v645, 0
        %658 = vmatpush.bf16.msra.mxu0 0
        %659 = vmatpush.bf16.msra.mxu0 0
        %660 = vmatpush.bf16.msra.mxu0 0
        %661 = vmatpush.bf16.msra.mxu0 0
        %662 = vmatpush.bf16.msra.mxu0 0
        %663 = vmatpush.bf16.msra.mxu0 0
        %664 = vmatpush.bf16.msra.mxu0 %v649
        %665 = vmatpush.bf16.msra.mxu0 %v647
        %666 = vmatmul.bf16.gmra.mxu0 %v656
        %v667 = vpop.f32.mrf.mxu0
        %v668 = vadd.f32 %v653, %v667
        %v669 = vpop.f32.mrf.mxu0
        %v670 = vadd.f32 %v653, %v669
        %671 = vdwg.mxu0
        %v672 = vpack.c.bf16 %v637, %v637
        %v673 = vpack.c.bf16 %v639, %v639
        %v674 = vpack.c.bf16 %v668, %v668
        %v675 = vpack.c.bf16 %v670, %v670
        %v678 = vperm.slane %v369, 0
        %v679 = vperm.slane %v370, 0
        %v683 = vsel %vm439, %v672, 0
        %v686 = vsel %vm439, %v674, 0
        %688 = vmatpush.bf16.xpose.msra.mxu0 0
        %689 = vmatpush.bf16.xpose.msra.mxu0 0
        %690 = vmatpush.bf16.xpose.msra.mxu0 0
        %691 = vmatpush.bf16.xpose.msra.mxu0 0
        %692 = vmatpush.bf16.xpose.msra.mxu0 0
        %693 = vmatpush.bf16.xpose.msra.mxu0 0
        %694 = vmatpush.bf16.xpose.msra.mxu0 0
        %695 = vmatpush.bf16.xpose.msra.mxu0 %v686
        %696 = vmatmul.bf16.gmra.mxu0 %v683
        %v697 = vpop.f32.mrf.mxu0
        %v698 = vadd.f32 %v678, %v697
        %v699 = vpop.f32.mrf.mxu0
        %700 = vdwg.mxu0
        %v702 = vsel %vm439, %v673, 0
        %v705 = vsel %vm439, %v675, 0
        %707 = vmatpush.bf16.xpose.msra.mxu0 0
        %708 = vmatpush.bf16.xpose.msra.mxu0 0
        %709 = vmatpush.bf16.xpose.msra.mxu0 0
        %710 = vmatpush.bf16.xpose.msra.mxu0 0
        %711 = vmatpush.bf16.xpose.msra.mxu0 0
        %712 = vmatpush.bf16.xpose.msra.mxu0 0
        %713 = vmatpush.bf16.xpose.msra.mxu0 0
        %714 = vmatpush.bf16.xpose.msra.mxu0 %v705
        %715 = vmatmul.bf16.gmra.mxu0 %v702
        %v716 = vpop.f32.mrf.mxu0
        %v717 = vadd.f32 %v679, %v716
        %v718 = vpop.f32.mrf.mxu0
        %719 = vdwg.mxu0
        %v720 = vsel %vm483, %v698, -inf
        %721 = vmax.xlane.f32.xlu0 %v720
        %v722 = vpop.xlane.xlu0 %721
        %v723 = vsel %vm483, %v717, -inf
        %724 = vmax.xlane.f32.xlu0 %v723
        %v725 = vpop.xlane.xlu0 %724
        %v726 = vsub.f32 %v698, %v722
        %v727 = vsub.f32 %v717, %v725
        %v728 = vmul.f32 %v726, 1.442695
        %v729 = vpow.pop %v728
        %v730 = vmul.f32 %v727, 1.442695
        %v731 = vpow.pop %v730
        %v732 = vsel %vm483, %v729, 0.0
        %733 = vadd.xlane.f32.xlu0 %v732
        %v734 = vpop.xlane.xlu0 %733
        %v735 = vsel %vm483, %v731, 0.0
        %736 = vadd.xlane.f32.xlu0 %v735
        %v737 = vpop.xlane.xlu0 %736
        %v738 = vrcp.pop %v734
        %v739 = vrcp.pop %v737
        %v740 = vmul.f32 %v729, %v738
        %v741 = vmul.f32 %v731, %v739
        %v742 = vpack.c.bf16 %v740, %v740
        %v743 = vpack.c.bf16 %v741, %v741
        %v745 = vsel %vm483, %v742, 0
        %v748 = vsel %vm511, %v367, 0
        %750 = vmatpush.bf16.msra.mxu0 0
        %751 = vmatpush.bf16.msra.mxu0 0
        %752 = vmatpush.bf16.msra.mxu0 0
        %753 = vmatpush.bf16.msra.mxu0 0
        %754 = vmatpush.bf16.msra.mxu0 0
        %755 = vmatpush.bf16.msra.mxu0 0
        %756 = vmatpush.bf16.msra.mxu0 0
        %757 = vmatpush.bf16.msra.mxu0 %v748
        %758 = vmatmul.bf16.gmra.mxu0 %v745
        %v759 = vpop.f32.mrf.mxu0
        %v760 = vadd.f32 %v606, %v759
        %v761 = vpop.f32.mrf.mxu0
        %762 = vdwg.mxu0
        %v764 = vsel %vm483, %v743, 0
        %v767 = vsel %vm511, %v368, 0
        %769 = vmatpush.bf16.msra.mxu0 0
        %770 = vmatpush.bf16.msra.mxu0 0
        %771 = vmatpush.bf16.msra.mxu0 0
        %772 = vmatpush.bf16.msra.mxu0 0
        %773 = vmatpush.bf16.msra.mxu0 0
        %774 = vmatpush.bf16.msra.mxu0 0
        %775 = vmatpush.bf16.msra.mxu0 0
        %776 = vmatpush.bf16.msra.mxu0 %v767
        %777 = vmatmul.bf16.gmra.mxu0 %v764
        %v778 = vpop.f32.mrf.mxu0
        %v779 = vadd.f32 %v607, %v778
        %v780 = vpop.f32.mrf.mxu0
        %781 = vdwg.mxu0
        %v782 = vsel %vm414, %v760, 0.0
        %783 = vadd.xlane.f32.xlu0 %v782
        %v784 = vpop.xlane.xlu0 %783
        %v785 = vsel %vm414, %v779, 0.0
        %786 = vadd.xlane.f32.xlu0 %v785
        %v787 = vpop.xlane.xlu0 %786
        %v788 = vmul.f32 %v784, %v559
        %v789 = vmul.f32 %v787, %v559
        %v790 = vsub.f32 %v760, %v788
        %v791 = vsub.f32 %v779, %v789
        %v792 = vmul.f32 %v790, %v790
        %v793 = vmul.f32 %v791, %v791
        %v794 = vsel %vm414, %v792, 0.0
        %795 = vadd.xlane.f32.xlu0 %v794
        %v796 = vpop.xlane.xlu0 %795
        %v797 = vsel %vm414, %v793, 0.0
        %798 = vadd.xlane.f32.xlu0 %v797
        %v799 = vpop.xlane.xlu0 %798
        %v800 = vmul.f32 %v796, %v559
        %v801 = vmul.f32 %v799, %v559
        %v802 = vadd.f32 %v800, 1e-05
        %v803 = vadd.f32 %v801, 1e-05
        %v804 = vrsqrt.pop %v802
        %v805 = vmul.f32 %v804, %v802
        %v806 = vmul.f32 %v805, %v804
        %v807 = vmul.f32 0.5, %v806
        %v808 = vsub.f32 1.5, %v807
        %v809 = vmul.f32 %v804, %v808
        %vm810 = vweird.f32 %v802
        %vm811 = vweird.f32 %v804
        %vm812 = vmor %vm810, %vm811
        %v813 = vsel %vm812, %v804, %v809
        %v814 = vrsqrt.pop %v803
        %v815 = vmul.f32 %v814, %v803
        %v816 = vmul.f32 %v815, %v814
        %v817 = vmul.f32 0.5, %v816
        %v818 = vsub.f32 1.5, %v817
        %v819 = vmul.f32 %v814, %v818
        %vm820 = vweird.f32 %v803
        %vm821 = vweird.f32 %v814
        %vm822 = vmor %vm820, %vm821
        %v823 = vsel %vm822, %v814, %v819
        %v824 = vmul.f32 %v790, %v813
        %v825 = vmul.f32 %v791, %v823
        %826 = vrot.lane.b32.xlu0 %v375, 96
        %v827 = vpop.permute.xlu0 %826
        %v828 = vrot.slane %v827, 1
        %v829 = vperm.slane %v828, 0
        %v831 = vmul.f32 %v824, %v829
        %v832 = vmul.f32 %v825, %v829
        %833 = vrot.lane.b32.xlu0 %v375, 64
        %v834 = vpop.permute.xlu0 %833
        %v835 = vrot.slane %v834, 1
        %v836 = vperm.slane %v835, 0
        %v838 = vadd.f32 %v831, %v836
        %v839 = vadd.f32 %v832, %v836
        %v840 = vpack.c.bf16 %v839, %v838
        %841 = vrot.lane.b32.xlu0 %v410, 64
        %v842 = vpop.permute.xlu0 %841
        %843 = vrot.lane.b32.xlu0 %v411, 64
        %v844 = vpop.permute.xlu0 %843
        %847 = vrot.lane.b32.xlu0 %v395, 64
        %v848 = vpop.permute.xlu0 %847
        %v851 = vsel %vm414, %v840, 0
        %853 = vmatpush.bf16.msra.mxu0 0
        %854 = vmatpush.bf16.msra.mxu0 0
        %855 = vmatpush.bf16.msra.mxu0 0
        %856 = vmatpush.bf16.msra.mxu0 0
        %857 = vmatpush.bf16.msra.mxu0 0
        %858 = vmatpush.bf16.msra.mxu0 0
        %859 = vmatpush.bf16.msra.mxu0 %v844
        %860 = vmatpush.bf16.msra.mxu0 %v842
        %861 = vmatmul.bf16.gmra.mxu0 %v851
        %v862 = vpop.f32.mrf.mxu0
        %v863 = vadd.f32 %v848, %v862
        %v864 = vpop.f32.mrf.mxu0
        %v865 = vadd.f32 %v848, %v864
        %866 = vdwg.mxu0
        %v867 = vmax.f32 %v863, 0.0
        %v868 = vmax.f32 %v865, 0.0
        %v869 = vadd.f32 %v867, %v838
        %v870 = vadd.f32 %v868, %v839
        %v871 = vsel %vm414, %v869, 0.0
        %872 = vadd.xlane.f32.xlu0 %v871
        %v873 = vpop.xlane.xlu0 %872
        %v874 = vsel %vm414, %v870, 0.0
        %875 = vadd.xlane.f32.xlu0 %v874
        %v876 = vpop.xlane.xlu0 %875
        %v877 = vmul.f32 %v873, %v559
        %v878 = vmul.f32 %v876, %v559
        %v879 = vsub.f32 %v869, %v877
        %v880 = vsub.f32 %v870, %v878
        %v881 = vmul.f32 %v879, %v879
        %v882 = vmul.f32 %v880, %v880
        %v883 = vsel %vm414, %v881, 0.0
        %884 = vadd.xlane.f32.xlu0 %v883
        %v885 = vpop.xlane.xlu0 %884
        %v886 = vsel %vm414, %v882, 0.0
        %887 = vadd.xlane.f32.xlu0 %v886
        %v888 = vpop.xlane.xlu0 %887
        %v889 = vmul.f32 %v885, %v559
        %v890 = vmul.f32 %v888, %v559
        %v891 = vadd.f32 %v889, 1e-05
        %v892 = vadd.f32 %v890, 1e-05
        %v893 = vrsqrt.pop %v891
        %v894 = vmul.f32 %v893, %v891
        %v895 = vmul.f32 %v894, %v893
        %v896 = vmul.f32 0.5, %v895
        %v897 = vsub.f32 1.5, %v896
        %v898 = vmul.f32 %v893, %v897
        %vm899 = vweird.f32 %v891
        %vm900 = vweird.f32 %v893
        %vm901 = vmor %vm899, %vm900
        %v902 = vsel %vm901, %v893, %v898
        %v903 = vrsqrt.pop %v892
        %v904 = vmul.f32 %v903, %v892
        %v905 = vmul.f32 %v904, %v903
        %v906 = vmul.f32 0.5, %v905
        %v907 = vsub.f32 1.5, %v906
        %v908 = vmul.f32 %v903, %v907
        %vm909 = vweird.f32 %v892
        %vm910 = vweird.f32 %v903
        %vm911 = vmor %vm909, %vm910
        %v912 = vsel %vm911, %v903, %v908
        %v913 = vmul.f32 %v879, %v902
        %v914 = vmul.f32 %v880, %v912
        %915 = vrot.lane.b32.xlu0 %v375, 32
        %v916 = vpop.permute.xlu0 %915
        %v917 = vrot.slane %v916, 1
        %v918 = vperm.slane %v917, 0
        %v920 = vmul.f32 %v913, %v918
        %v921 = vmul.f32 %v914, %v918
        %v922 = vrot.slane %v375, 2
        %v923 = vperm.slane %v922, 0
        %v925 = vadd.f32 %v920, %v923
        %v926 = vadd.f32 %v921, %v923
        %927 = vst.msk [vmem:[#allocation2] sm:$0xff] %vm414, %v925
        %928 = vst.msk [vmem:[#allocation2 + $0x8] sm:$0xff] %vm414, %v926
        // Predicated region
        $region49: #{encoder_decoder_forward.3} parent=43 // pred_check
          %p929 = pneg %p204
        $region50: #{encoder_decoder_forward.3} parent=43 // pred_check_branch
          %931 = sbr.rel (%p929) target = $region52
        $region51: #{encoder_decoder_forward.3} parent=43 // pred_region
          %s932 = smul.u32 2, %s22
          %934 = vsyncadd [#allocation3], 0
          %s935 = smul.addr %s932, 8
          %s936 = scalar_lea.hbm %s6, %s935
          %s937 = sshll.u32 [#allocation2], 4
          %s938 = int_to_ptr.vmem [resolvable:$true] %s937
          %s939 = sshll.u32 %s936, 4
          %s940 = int_to_ptr.hbm [resolvable:$true] %s939
          %945 = dma.vmem_to_hbm [thread:$0]  %s938, 256, %s940, [#allocation3], 128, 128, 8
        $region52: #{encoder_decoder_forward.3} parent=43 // pred_fallthru
          _
        // Predicated region
        $region53: #{encoder_decoder_forward.3} parent=43 // pred_check
          %p946 = pneg %p204
        $region54: #{encoder_decoder_forward.3} parent=43 // pred_check_branch
          %948 = sbr.rel (%p946) target = $region56
        $region55: #{encoder_decoder_forward.3} parent=43 // pred_region
          %950 = dma.done [#allocation3], 256
        $region56: #{encoder_decoder_forward.3} parent=43 // pred_fallthru
          _
      $region44: #{encoder_decoder_forward.3} parent=5 // pred_fallthru
        _
      %p951 = scmp.le.s32.totalorder 2, %s13
      // Predicated region
      $region57: #{encoder_decoder_forward.3} parent=5 // pred_check
        %p952 = pneg %p951
      $region58: #{encoder_decoder_forward.3} parent=5 // pred_check_branch
        %954 = sbr.rel (%p952) target = $region60
      $region59: #{encoder_decoder_forward.3} parent=5 // pred_region
        %s955 = ssub.s32 %s13, 2
      $region60: #{encoder_decoder_forward.3} parent=5 // pred_fallthru
        _
    $region6: #{encoder_decoder_forward.3} parent=1 // loop_footer
      %s17 = sadd.s32 1, %s13
    $region7: #{encoder_decoder_forward.3} parent=1 // loop_footer_branch
      %12 = sbr.rel target = $region3
    $region8: #{encoder_decoder_forward.3} parent=1 // loop_exit
      _
    %956 = vsyncpa [#allocation3], 1
    %s957 = scalar_lea.sflag [#allocation3], 1
    %958 = vsyncpa %s957, 1

</llo_original>
